<compile_context>
chip_gen: v6e
topology: v6e:2x2x1
jax: 0.10.0
libtpu: 0.0.40
codegen_flags: <defaults>
</compile_context>

<pallas_src>
import functools

import jax
import jax.numpy as jnp
from jax.experimental import pallas as pl
from jax.experimental.pallas import tpu as pltpu


def _round_up(x, m):
    return ((x + m - 1) // m) * m


def _conv_kernel(x_ref, w_ref, b_ref, o_ref, *, kernel_size, padded_width):
    """One (batch, spatial-tile) grid step.

    x_ref : (1, C_in, Lx)      flattened (padded) image rows for this batch elem
    w_ref : (K*K, C_out, C_in) resident weights, one (C_out, C_in) matrix per tap
    b_ref : (C_out, 1)         resident bias column
    o_ref : (1, C_out, T)      lane-dense output tile (spatial on the lane axis)
    """
    K = kernel_size
    c_out, t = o_ref.shape[1], o_ref.shape[2]
    acc = jnp.zeros((c_out, t), dtype=jnp.float32)
    for kk in range(K * K):                                  # static tap loop
        shift = (kk // K) * padded_width + (kk % K)          # static Python int
        xs = x_ref[0, :, shift:shift + t]                    # (C_in, T), static slice
        acc = acc + jnp.dot(w_ref[kk], xs, preferred_element_type=jnp.float32)
    o_ref[0] = (acc + b_ref[...]).astype(o_ref.dtype)


def conv2d(x, weight, bias=None, *, stride=1, padding=0, dilation=1, groups=1,
           padding_mode="zeros", keep_spatial_size=True,
           tile_hw=512, vmem_limit_bytes=32 * 1024 * 1024):
    """Forward pass of the PyTorch `Conv` block (nn.Conv2d, odd square kernel).

    x      : (N, C_in, H, W)   float32, NCHW (PyTorch layout)
    weight : (C_out, C_in, K, K)  (PyTorch OIHW layout)
    bias   : (C_out,) or None
    returns: (N, C_out, H_out, W_out); H_out == H when keep_spatial_size=True.
    """
    N, C_in, H, W = x.shape
    C_out, C_in_w, KH, KW = weight.shape
    if KH != KW or KH % 2 != 1:
        raise ValueError("only square, odd kernel_size is supported")
    if C_in_w != C_in:
        raise ValueError("weight / input channel mismatch")
    if stride != 1 or dilation != 1 or groups != 1 or padding_mode != "zeros":
        # TODO(synk): stride>1, dilation>1, groups>1 and non-'zeros' padding
        # modes of nn.Conv2d are not implemented in this Pallas kernel.
        raise NotImplementedError(
            "only stride=1, dilation=1, groups=1, padding_mode='zeros'")
    K = KH
    P = K // 2 if keep_spatial_size else padding

    if bias is None:
        bias = jnp.zeros((C_out,), dtype=x.dtype)

    H_out = H + 2 * P - K + 1
    W_out = W + 2 * P - K + 1
    Wp = W + 2 * P            # padded row width
    Ltot = H_out * Wp         # flat output is computed over the (H_out, Wp) grid;
                              # the 2P scratch columns per row are sliced off below.

    if K == 1 and P == 0:
        # 1x1 conv: no halo -> stream the flattened spatial axis tile by tile
        # (lane-dense (C_out, C_in) @ (C_in, T) matmuls, T a multiple of 128).
        tile = min(_round_up(tile_hw, 128), _round_up(Ltot, 128))
        n_tiles = pl.cdiv(Ltot, tile)
        Lgrid = n_tiles * tile
        Lin = Lgrid
        x_flat = x.reshape(N, C_in, H * W)            # free reshape, NCHW kept
        if Lin > H * W:
            x_flat = jnp.pad(x_flat, ((0, 0), (0, 0), (0, Lin - H * W)))
        x_spec = pl.BlockSpec((1, C_in, tile), lambda n, j: (n, 0, j))
    else:
        # KxK conv: taps need a halo between spatial tiles, so keep the whole
        # zero-padded image of one batch element resident in VMEM and take
        # static per-tap slices of its flattened spatial axis.
        # TODO(synk): row-tiled variant (with halo rows) for images whose padded
        # per-sample slab does not fit VMEM.
        tile = _round_up(Ltot, 128)                   # lane-dense output slab
        n_tiles = 1
        Lgrid = tile
        Lin = Lgrid + (K - 1) * (Wp + 1)              # covers the largest tap shift
        xp = jnp.pad(x, ((0, 0), (0, 0), (P, P), (P, P)))
        x_flat = xp.reshape(N, C_in, (H + 2 * P) * Wp)
        x_flat = jnp.pad(x_flat, ((0, 0), (0, 0), (0, Lin - x_flat.shape[-1])))
        x_spec = pl.BlockSpec((1, C_in, Lin), lambda n, j: (n, 0, 0))

    # One (C_out, C_in) matrix per kernel tap; tiny, stays resident in VMEM.
    w_taps = jnp.transpose(weight.reshape(C_out, C_in, K * K), (2, 0, 1))
    b_col = bias.reshape(C_out, 1).astype(jnp.float32)

    kernel = functools.partial(_conv_kernel, kernel_size=K, padded_width=Wp)

    out_flat = pl.pallas_call(
        kernel,
        out_shape=jax.ShapeDtypeStruct((N, C_out, Lgrid), x.dtype),
        grid_spec=pltpu.PrefetchScalarGridSpec(
            num_scalar_prefetch=0,
            grid=(N, n_tiles),
            in_specs=[
                x_spec,
                # Constant index_map -> fetched once, kept resident.  (For very
                # large C_in/C_out, add pipeline_mode=pl.Buffered(1) to skip the
                # second buffer; at these channel counts it is noise.)
                pl.BlockSpec((K * K, C_out, C_in), lambda n, j: (0, 0, 0)),
                pl.BlockSpec((C_out, 1), lambda n, j: (0, 0)),
            ],
            out_specs=pl.BlockSpec((1, C_out, tile), lambda n, j: (n, 0, j)),
        ),
        compiler_params=pltpu.CompilerParams(
            # Both axes are independent -> shardable across v7x's 2 TensorCores.
            dimension_semantics=("parallel", "parallel"),
            vmem_limit_bytes=vmem_limit_bytes,
        ),
    )(x_flat, w_taps, b_col)

    # Drop scratch lanes / scratch columns and restore (N, C_out, H_out, W_out).
    out = out_flat[:, :, :Ltot].reshape(N, C_out, H_out, Wp)[:, :, :, :W_out]
    return out


def _reference(x, weight, bias, K):
    P = K // 2
    ref = jax.lax.conv_general_dilated(
        x, weight, window_strides=(1, 1), padding=[(P, P), (P, P)],
        dimension_numbers=("NCHW", "OIHW", "NCHW"),
        precision=jax.lax.Precision.HIGHEST)
    return ref + bias.reshape(1, -1, 1, 1)


if __name__ == "__main__":
    key = jax.random.PRNGKey(0)

    def run_case(case_key, N, C_in, C_out, H, W, K):
        kx, kw, kb = jax.random.split(case_key, 3)
        x = jax.random.normal(kx, (N, C_in, H, W), dtype=jnp.float32)
        w = jax.random.normal(kw, (C_out, C_in, K, K), dtype=jnp.float32) * 0.1
        b = jax.random.normal(kb, (C_out,), dtype=jnp.float32) * 0.1

        out = conv2d(x, w, b)                     # keep_spatial_size=True default
        out = jax.block_until_ready(out)

        ref = _reference(x, w, b, K)
        assert out.shape == ref.shape, (out.shape, ref.shape)
        assert jnp.allclose(out, ref, atol=1e-3, rtol=1e-3), \
            ("mismatch", K, H, W, float(jnp.max(jnp.abs(out - ref))))

    k1, k2, k3, k4 = jax.random.split(key, 4)
    run_case(k1, 2, 4, 8, 16, 16, 3)   # typical 3x3 'same' conv (module spec)
    run_case(k2, 2, 4, 8, 16, 16, 1)   # 1x1 conv (previous kernel's case)
    run_case(k3, 2, 4, 8, 40, 40, 1)   # exercises multi-tile + ragged padding
    run_case(k4, 2, 4, 8, 16, 16, 5)   # larger halo

    print("KERNEL_OK")
</pallas_src>

<mosaic_0001>
module attributes {stable_mosaic.version = 11 : i64} {
  func.func @_conv_kernel(%arg0: i32, %arg1: i32, %arg2: memref<1x4x422xf32, #tpu.memory_space<vmem>>, %arg3: memref<9x8x4xf32, #tpu.memory_space<vmem>>, %arg4: memref<8x1xf32, #tpu.memory_space<vmem>>, %arg5: memref<1x8x384xf32, #tpu.memory_space<vmem>>) attributes {dimension_semantics = [#tpu.dimension_semantics<parallel>, #tpu.dimension_semantics<parallel>], iteration_bounds = array<i64: 2, 1>, scalar_prefetch = 0 : i64, scratch_operands = 0 : i64, tpu.core_type = #tpu.core_type<tc>, window_params = [{transform_indices = @transform_0, window_bounds = array<i64: 1, 4, 422>}, {pipeline_mode = #tpu.pipeline_mode<synchronous>, transform_indices = @transform_1, window_bounds = array<i64: 9, 8, 4>}, {pipeline_mode = #tpu.pipeline_mode<synchronous>, transform_indices = @transform_2, window_bounds = array<i64: 8, 1>}, {transform_indices = @transform_3, window_bounds = array<i64: 1, 8, 384>}]} {
    %cst = arith.constant 0.000000e+00 : f32
    %0 = vector.broadcast %cst : f32 to vector<8x384xf32>
    %c0 = arith.constant 0 : index
    %c0_0 = arith.constant 0 : index
    %c0_1 = arith.constant 0 : index
    %1 = vector.load %arg2[%c0, %c0_0, %c0_1] : memref<1x4x422xf32, #tpu.memory_space<vmem>>, vector<1x4x384xf32>
    %2 = vector.shape_cast %1 : vector<1x4x384xf32> to vector<4x384xf32>
    %c0_2 = arith.constant 0 : index
    %c0_3 = arith.constant 0 : index
    %c0_4 = arith.constant 0 : index
    %3 = vector.load %arg3[%c0_2, %c0_3, %c0_4] : memref<9x8x4xf32, #tpu.memory_space<vmem>>, vector<1x8x4xf32>
    %4 = vector.shape_cast %3 : vector<1x8x4xf32> to vector<8x4xf32>
    %cst_5 = arith.constant dense<0.000000e+00> : vector<8x384xf32>
    %5 = tpu.matmul %4, %2, %cst_5 {dimension_numbers = #tpu.dot_dimension_numbers<[1], [0], [0], [1], [0, 0, 1, 1], [], []>} : vector<8x4xf32>, vector<4x384xf32>, vector<8x384xf32> -> vector<8x384xf32>
    %6 = arith.addf %0, %5 : vector<8x384xf32>
    %c0_6 = arith.constant 0 : index
    %c0_7 = arith.constant 0 : index
    %c1 = arith.constant 1 : index
    %7 = vector.load %arg2[%c0_6, %c0_7, %c1] : memref<1x4x422xf32, #tpu.memory_space<vmem>>, vector<1x4x384xf32>
    %8 = vector.shape_cast %7 : vector<1x4x384xf32> to vector<4x384xf32>
    %c1_8 = arith.constant 1 : index
    %c0_9 = arith.constant 0 : index
    %c0_10 = arith.constant 0 : index
    %9 = vector.load %arg3[%c1_8, %c0_9, %c0_10] : memref<9x8x4xf32, #tpu.memory_space<vmem>>, vector<1x8x4xf32>
    %10 = vector.shape_cast %9 : vector<1x8x4xf32> to vector<8x4xf32>
    %cst_11 = arith.constant dense<0.000000e+00> : vector<8x384xf32>
    %11 = tpu.matmul %10, %8, %cst_11 {dimension_numbers = #tpu.dot_dimension_numbers<[1], [0], [0], [1], [0, 0, 1, 1], [], []>} : vector<8x4xf32>, vector<4x384xf32>, vector<8x384xf32> -> vector<8x384xf32>
    %12 = arith.addf %6, %11 : vector<8x384xf32>
    %c0_12 = arith.constant 0 : index
    %c0_13 = arith.constant 0 : index
    %c2 = arith.constant 2 : index
    %13 = vector.load %arg2[%c0_12, %c0_13, %c2] : memref<1x4x422xf32, #tpu.memory_space<vmem>>, vector<1x4x384xf32>
    %14 = vector.shape_cast %13 : vector<1x4x384xf32> to vector<4x384xf32>
    %c2_14 = arith.constant 2 : index
    %c0_15 = arith.constant 0 : index
    %c0_16 = arith.constant 0 : index
    %15 = vector.load %arg3[%c2_14, %c0_15, %c0_16] : memref<9x8x4xf32, #tpu.memory_space<vmem>>, vector<1x8x4xf32>
    %16 = vector.shape_cast %15 : vector<1x8x4xf32> to vector<8x4xf32>
    %cst_17 = arith.constant dense<0.000000e+00> : vector<8x384xf32>
    %17 = tpu.matmul %16, %14, %cst_17 {dimension_numbers = #tpu.dot_dimension_numbers<[1], [0], [0], [1], [0, 0, 1, 1], [], []>} : vector<8x4xf32>, vector<4x384xf32>, vector<8x384xf32> -> vector<8x384xf32>
    %18 = arith.addf %12, %17 : vector<8x384xf32>
    %c0_18 = arith.constant 0 : index
    %c0_19 = arith.constant 0 : index
    %c18 = arith.constant 18 : index
    %19 = vector.load %arg2[%c0_18, %c0_19, %c18] : memref<1x4x422xf32, #tpu.memory_space<vmem>>, vector<1x4x384xf32>
    %20 = vector.shape_cast %19 : vector<1x4x384xf32> to vector<4x384xf32>
    %c3 = arith.constant 3 : index
    %c0_20 = arith.constant 0 : index
    %c0_21 = arith.constant 0 : index
    %21 = vector.load %arg3[%c3, %c0_20, %c0_21] : memref<9x8x4xf32, #tpu.memory_space<vmem>>, vector<1x8x4xf32>
    %22 = vector.shape_cast %21 : vector<1x8x4xf32> to vector<8x4xf32>
    %cst_22 = arith.constant dense<0.000000e+00> : vector<8x384xf32>
    %23 = tpu.matmul %22, %20, %cst_22 {dimension_numbers = #tpu.dot_dimension_numbers<[1], [0], [0], [1], [0, 0, 1, 1], [], []>} : vector<8x4xf32>, vector<4x384xf32>, vector<8x384xf32> -> vector<8x384xf32>
    %24 = arith.addf %18, %23 : vector<8x384xf32>
    %c0_23 = arith.constant 0 : index
    %c0_24 = arith.constant 0 : index
    %c19 = arith.constant 19 : index
    %25 = vector.load %arg2[%c0_23, %c0_24, %c19] : memref<1x4x422xf32, #tpu.memory_space<vmem>>, vector<1x4x384xf32>
    %26 = vector.shape_cast %25 : vector<1x4x384xf32> to vector<4x384xf32>
    %c4 = arith.constant 4 : index
    %c0_25 = arith.constant 0 : index
    %c0_26 = arith.constant 0 : index
    %27 = vector.load %arg3[%c4, %c0_25, %c0_26] : memref<9x8x4xf32, #tpu.memory_space<vmem>>, vector<1x8x4xf32>
    %28 = vector.shape_cast %27 : vector<1x8x4xf32> to vector<8x4xf32>
    %cst_27 = arith.constant dense<0.000000e+00> : vector<8x384xf32>
    %29 = tpu.matmul %28, %26, %cst_27 {dimension_numbers = #tpu.dot_dimension_numbers<[1], [0], [0], [1], [0, 0, 1, 1], [], []>} : vector<8x4xf32>, vector<4x384xf32>, vector<8x384xf32> -> vector<8x384xf32>
    %30 = arith.addf %24, %29 : vector<8x384xf32>
    %c0_28 = arith.constant 0 : index
    %c0_29 = arith.constant 0 : index
    %c20 = arith.constant 20 : index
    %31 = vector.load %arg2[%c0_28, %c0_29, %c20] : memref<1x4x422xf32, #tpu.memory_space<vmem>>, vector<1x4x384xf32>
    %32 = vector.shape_cast %31 : vector<1x4x384xf32> to vector<4x384xf32>
    %c5 = arith.constant 5 : index
    %c0_30 = arith.constant 0 : index
    %c0_31 = arith.constant 0 : index
    %33 = vector.load %arg3[%c5, %c0_30, %c0_31] : memref<9x8x4xf32, #tpu.memory_space<vmem>>, vector<1x8x4xf32>
    %34 = vector.shape_cast %33 : vector<1x8x4xf32> to vector<8x4xf32>
    %cst_32 = arith.constant dense<0.000000e+00> : vector<8x384xf32>
    %35 = tpu.matmul %34, %32, %cst_32 {dimension_numbers = #tpu.dot_dimension_numbers<[1], [0], [0], [1], [0, 0, 1, 1], [], []>} : vector<8x4xf32>, vector<4x384xf32>, vector<8x384xf32> -> vector<8x384xf32>
    %36 = arith.addf %30, %35 : vector<8x384xf32>
    %c0_33 = arith.constant 0 : index
    %c0_34 = arith.constant 0 : index
    %c36 = arith.constant 36 : index
    %37 = vector.load %arg2[%c0_33, %c0_34, %c36] : memref<1x4x422xf32, #tpu.memory_space<vmem>>, vector<1x4x384xf32>
    %38 = vector.shape_cast %37 : vector<1x4x384xf32> to vector<4x384xf32>
    %c6 = arith.constant 6 : index
    %c0_35 = arith.constant 0 : index
    %c0_36 = arith.constant 0 : index
    %39 = vector.load %arg3[%c6, %c0_35, %c0_36] : memref<9x8x4xf32, #tpu.memory_space<vmem>>, vector<1x8x4xf32>
    %40 = vector.shape_cast %39 : vector<1x8x4xf32> to vector<8x4xf32>
    %cst_37 = arith.constant dense<0.000000e+00> : vector<8x384xf32>
    %41 = tpu.matmul %40, %38, %cst_37 {dimension_numbers = #tpu.dot_dimension_numbers<[1], [0], [0], [1], [0, 0, 1, 1], [], []>} : vector<8x4xf32>, vector<4x384xf32>, vector<8x384xf32> -> vector<8x384xf32>
    %42 = arith.addf %36, %41 : vector<8x384xf32>
    %c0_38 = arith.constant 0 : index
    %c0_39 = arith.constant 0 : index
    %c37 = arith.constant 37 : index
    %43 = vector.load %arg2[%c0_38, %c0_39, %c37] : memref<1x4x422xf32, #tpu.memory_space<vmem>>, vector<1x4x384xf32>
    %44 = vector.shape_cast %43 : vector<1x4x384xf32> to vector<4x384xf32>
    %c7 = arith.constant 7 : index
    %c0_40 = arith.constant 0 : index
    %c0_41 = arith.constant 0 : index
    %45 = vector.load %arg3[%c7, %c0_40, %c0_41] : memref<9x8x4xf32, #tpu.memory_space<vmem>>, vector<1x8x4xf32>
    %46 = vector.shape_cast %45 : vector<1x8x4xf32> to vector<8x4xf32>
    %cst_42 = arith.constant dense<0.000000e+00> : vector<8x384xf32>
    %47 = tpu.matmul %46, %44, %cst_42 {dimension_numbers = #tpu.dot_dimension_numbers<[1], [0], [0], [1], [0, 0, 1, 1], [], []>} : vector<8x4xf32>, vector<4x384xf32>, vector<8x384xf32> -> vector<8x384xf32>
    %48 = arith.addf %42, %47 : vector<8x384xf32>
    %c0_43 = arith.constant 0 : index
    %c0_44 = arith.constant 0 : index
    %c38 = arith.constant 38 : index
    %49 = vector.load %arg2[%c0_43, %c0_44, %c38] : memref<1x4x422xf32, #tpu.memory_space<vmem>>, vector<1x4x384xf32>
    %50 = vector.shape_cast %49 : vector<1x4x384xf32> to vector<4x384xf32>
    %c8 = arith.constant 8 : index
    %c0_45 = arith.constant 0 : index
    %c0_46 = arith.constant 0 : index
    %51 = vector.load %arg3[%c8, %c0_45, %c0_46] : memref<9x8x4xf32, #tpu.memory_space<vmem>>, vector<1x8x4xf32>
    %52 = vector.shape_cast %51 : vector<1x8x4xf32> to vector<8x4xf32>
    %cst_47 = arith.constant dense<0.000000e+00> : vector<8x384xf32>
    %53 = tpu.matmul %52, %50, %cst_47 {dimension_numbers = #tpu.dot_dimension_numbers<[1], [0], [0], [1], [0, 0, 1, 1], [], []>} : vector<8x4xf32>, vector<4x384xf32>, vector<8x384xf32> -> vector<8x384xf32>
    %54 = arith.addf %48, %53 : vector<8x384xf32>
    %c0_48 = arith.constant 0 : index
    %c0_49 = arith.constant 0 : index
    %55 = vector.load %arg4[%c0_48, %c0_49] : memref<8x1xf32, #tpu.memory_space<vmem>>, vector<8x1xf32>
    %56 = vector.broadcast %55 : vector<8x1xf32> to vector<8x384xf32>
    %57 = arith.addf %54, %56 : vector<8x384xf32>
    %c0_50 = arith.constant 0 : index
    %c0_51 = arith.constant 0 : index
    %c0_52 = arith.constant 0 : index
    %58 = vector.load %arg5[%c0_50, %c0_51, %c0_52] : memref<1x8x384xf32, #tpu.memory_space<vmem>>, vector<1x8x384xf32>
    %59 = vector.shape_cast %58 : vector<1x8x384xf32> to vector<8x384xf32>
    %60 = vector.shape_cast %57 : vector<8x384xf32> to vector<1x8x384xf32>
    tpu.vector_store %arg5[%c0_50, %c0_51, %c0_52], %60 {strides = array<i32>} : memref<1x8x384xf32, #tpu.memory_space<vmem>>, vector<1x8x384xf32>,
    return
  }
  func.func @transform_0(%arg0: i32, %arg1: i32) -> (i32, i32, i32) {
    %c0_i32 = arith.constant 0 : i32
    %c0_i32_0 = arith.constant 0 : i32
    %c0_i32_1 = arith.constant 0 : i32
    return %arg0, %c0_i32, %c0_i32_0 : i32, i32, i32
  }
  func.func @transform_1(%arg0: i32, %arg1: i32) -> (i32, i32, i32) {
    %c0_i32 = arith.constant 0 : i32
    %c0_i32_0 = arith.constant 0 : i32
    %c0_i32_1 = arith.constant 0 : i32
    %c0_i32_2 = arith.constant 0 : i32
    return %c0_i32, %c0_i32_0, %c0_i32_1 : i32, i32, i32
  }
  func.func @transform_2(%arg0: i32, %arg1: i32) -> (i32, i32) {
    %c0_i32 = arith.constant 0 : i32
    %c0_i32_0 = arith.constant 0 : i32
    %c0_i32_1 = arith.constant 0 : i32
    return %c0_i32, %c0_i32_0 : i32, i32
  }
  func.func @transform_3(%arg0: i32, %arg1: i32) -> (i32, i32, i32) {
    %c0_i32 = arith.constant 0 : i32
    %c0_i32_0 = arith.constant 0 : i32
    return %arg0, %c0_i32, %arg1 : i32, i32, i32
  }
}

</mosaic_0001>

<llo_original>
// kernel: tpu_custom_call.1
$region0: #{tpu_custom_call.1}
  #allocation0 [shape = 'u32[]', space=smem, size = 0x4, offset = 0x4, fixed_abs, tag = 'smem constant byte address 0x4 - core index']
  #allocation1 [shape = 'u32[144,128]{1,0:T(1,128)}', space=vmem, size = 0x12000, scoped, tag = 'internal scratch']
  %s0 = inlined_call_operand.vmem [shape: f32[2,4,422], index: 0, kind: input, shape index: {}]
  %s1 = inlined_call_operand.vmem [shape: f32[9,8,4], index: 1, kind: input, shape index: {}]
  %s2 = inlined_call_operand.vmem [shape: f32[8,1], index: 2, kind: input, shape index: {}]
  %s3 = inlined_call_operand.hbm [shape: f32[2,8,384], index: 3, kind: output, shape index: {}]
  %s4 = sld [smem:[#allocation0]]
  $region45: #{tpu_custom_call.1} parent=0
    _
  %s6 = ssub.s32 1, %s4
  %s7 = scalar_select 0, %s6, %s4
  $region1: #{tpu_custom_call.1} parent=0
    #allocation2 [shape = 'u8[24576]{0}', space=vmem, size = 0x6000, scoped, tag = 'output window, operand 0']
    #allocation3 [shape = 's32[2]{0}', space=sflag, size = 0x8, scoped, tag = 'scoped memory for tpu_custom_call.1']
    %8 = vsyncpa [#allocation3], 0
    %s9 = scalar_lea.sflag [#allocation3], 1
    %10 = vsyncpa %s9, 0
    loop: start=0, step=1, limit=4
    $region2: #{tpu_custom_call.1} parent=1 // loop_pre_header
      _
    $region3: #{tpu_custom_call.1} parent=1 // loop_header
      %s12 = sphi 0, %s16
      %p13 = scmp.ge.s32.totalorder %s12, 4
      %s19 = sphi 0, %s31
      %s20 = sphi 0, %s27
      %s21 = sphi 0, %s19
      %s22 = sphi 0, %s20
      %s23 = sphi 0, %s21
      %s24 = sphi 0, %s22
      %s34 = sphi 0, %s36
      %s37 = sphi 0, %s34
      %s38 = sphi 0, %s37
      %s54 = sphi 0, %s38
      %s58 = sphi 0, %s58
      %s60 = sphi 0, %s58
      %s61 = sphi 0, %s60
      %s75 = sphi 0, %s61
      %s79 = sphi 0, %s79
      %s81 = sphi 0, %s79
      %s82 = sphi 0, %s81
      %s96 = sphi 0, %s82
      %s104 = sphi 0, %s106
      %s107 = sphi 0, %s104
      %s108 = sphi 0, %s107
      %s124 = sphi 0, %s108
    $region4: #{tpu_custom_call.1} parent=1 // loop_header_branch
      %15 = sbr.rel (%p13) target = $region8
    $region5: #{tpu_custom_call.1} parent=1 // loop_body
      %s17 = ssub.s32 %s12, 1
      %s18 = ssub.s32 %s12, 2
      %s25 = sadd.s32 1, %s20
      %p26 = scmp.ge.s32.totalorder %s25, 1
      %s27 = scalar_select %p26, 0, %s25
      %s28 = sadd.s32 1, %s19
      %s29 = scalar_select %p26, %s28, %s19
      %p30 = scmp.ge.s32.totalorder %s29, 2
      %s31 = scalar_select %p30, 0, %s29
      %s32 = ssub.s32 %s19, %s31
      %p33 = scmp.eq.s32.totalorder %s32, 0
      %s35 = sadd.s32 %s34, 1
      %s36 = scalar_select %p33, %s34, %s35
      %p39 = pneg %p33
      %p40 = scmp.eq.s32.totalorder %s12, 1
      %p41 = por %p39, %p40
      %p42 = scmp.ne.s32.totalorder %s34, %s37
      %p43 = scmp.eq.s32.totalorder %s12, 0
      %p44 = por %p42, %p43
      %p45 = scmp.ne.s32.totalorder %s34, %s37
      %p46 = scmp.eq.s32.totalorder %s17, 1
      %p47 = por %p45, %p46
      %p48 = scmp.ne.s32.totalorder %s37, %s38
      %p49 = scmp.eq.s32.totalorder %s17, 0
      %p50 = por %p48, %p49
      %p51 = scmp.ne.s32.totalorder %s37, %s38
      %p52 = scmp.eq.s32.totalorder %s18, 1
      %p53 = por %p51, %p52
      %p55 = scmp.ne.s32.totalorder %s38, %s54
      %p56 = scmp.eq.s32.totalorder %s18, 0
      %p57 = por %p55, %p56
      %s59 = sadd.s32 %s58, 1
      %p62 = scmp.eq.s32.totalorder %s12, 1
      %p63 = scmp.ne.s32.totalorder %s58, %s60
      %p64 = scmp.eq.s32.totalorder %s12, 0
      %p65 = por %p63, %p64
      %p66 = scmp.ne.s32.totalorder %s58, %s60
      %p67 = scmp.eq.s32.totalorder %s17, 1
      %p68 = por %p66, %p67
      %p69 = scmp.ne.s32.totalorder %s60, %s61
      %p70 = scmp.eq.s32.totalorder %s17, 0
      %p71 = por %p69, %p70
      %p72 = scmp.ne.s32.totalorder %s60, %s61
      %p73 = scmp.eq.s32.totalorder %s18, 1
      %p74 = por %p72, %p73
      %p76 = scmp.ne.s32.totalorder %s61, %s75
      %p77 = scmp.eq.s32.totalorder %s18, 0
      %p78 = por %p76, %p77
      %s80 = sadd.s32 %s79, 1
      %p83 = scmp.eq.s32.totalorder %s12, 1
      %p84 = scmp.ne.s32.totalorder %s79, %s81
      %p85 = scmp.eq.s32.totalorder %s12, 0
      %p86 = por %p84, %p85
      %p87 = scmp.ne.s32.totalorder %s79, %s81
      %p88 = scmp.eq.s32.totalorder %s17, 1
      %p89 = por %p87, %p88
      %p90 = scmp.ne.s32.totalorder %s81, %s82
      %p91 = scmp.eq.s32.totalorder %s17, 0
      %p92 = por %p90, %p91
      %p93 = scmp.ne.s32.totalorder %s81, %s82
      %p94 = scmp.eq.s32.totalorder %s18, 1
      %p95 = por %p93, %p94
      %p97 = scmp.ne.s32.totalorder %s82, %s96
      %p98 = scmp.eq.s32.totalorder %s18, 0
      %p99 = por %p97, %p98
      %s100 = ssub.s32 %s19, %s31
      %s101 = ssub.s32 %s20, %s27
      %s102 = sor.u32 %s100, %s101
      %p103 = scmp.eq.s32.totalorder %s102, 0
      %s105 = sadd.s32 %s104, 1
      %s106 = scalar_select %p103, %s104, %s105
      %p109 = pneg %p103
      %p110 = scmp.eq.s32.totalorder %s12, 1
      %p111 = por %p109, %p110
      %p112 = scmp.ne.s32.totalorder %s104, %s107
      %p113 = scmp.eq.s32.totalorder %s12, 0
      %p114 = por %p112, %p113
      %p115 = scmp.ne.s32.totalorder %s104, %s107
      %p116 = scmp.eq.s32.totalorder %s17, 1
      %p117 = por %p115, %p116
      %p118 = scmp.ne.s32.totalorder %s107, %s108
      %p119 = scmp.eq.s32.totalorder %s17, 0
      %p120 = por %p118, %p119
      %p121 = scmp.ne.s32.totalorder %s107, %s108
      %p122 = scmp.eq.s32.totalorder %s18, 1
      %p123 = por %p121, %p122
      %p125 = scmp.ne.s32.totalorder %s108, %s124
      %p126 = scmp.eq.s32.totalorder %s18, 0
      %p127 = por %p125, %p126
      %p128 = scmp.le.s32.totalorder 1, %s12
      %p129 = scmp.lt.s32.totalorder %s12, 3
      %p130 = pnand %p128, %p129
      %p131 = pneg %p130
      // Predicated region
      $region9: #{tpu_custom_call.1} parent=5 // pred_check
        _
      $region10: #{tpu_custom_call.1} parent=5 // pred_check_branch
        %133 = sbr.rel (%p130) target = $region12
      $region11: #{tpu_custom_call.1} parent=5 // pred_region
        %s134 = ssub.s32 %s12, 1
        // Predicated region
        $region13: #{tpu_custom_call.1} parent=11 // pred_check
          %p135 = pneg %p71
        $region14: #{tpu_custom_call.1} parent=11 // pred_check_branch
          %137 = sbr.rel (%p135) target = $region16
        $region15: #{tpu_custom_call.1} parent=11 // pred_region
          _
        $region16: #{tpu_custom_call.1} parent=11 // pred_fallthru
          _
        // Predicated region
        $region17: #{tpu_custom_call.1} parent=11 // pred_check
          %p138 = pneg %p92
        $region18: #{tpu_custom_call.1} parent=11 // pred_check_branch
          %140 = sbr.rel (%p138) target = $region20
        $region19: #{tpu_custom_call.1} parent=11 // pred_region
          _
        $region20: #{tpu_custom_call.1} parent=11 // pred_fallthru
          _
      $region12: #{tpu_custom_call.1} parent=5 // pred_fallthru
        _
      %p141 = scmp.lt.s32.totalorder %s12, 2
      // Predicated region
      $region21: #{tpu_custom_call.1} parent=5 // pred_check
        %p142 = pneg %p141
      $region22: #{tpu_custom_call.1} parent=5 // pred_check_branch
        %144 = sbr.rel (%p142) target = $region24
      $region23: #{tpu_custom_call.1} parent=5 // pred_region
        // Predicated region
        $region25: #{tpu_custom_call.1} parent=23 // pred_check
          %p145 = pneg %p44
        $region26: #{tpu_custom_call.1} parent=23 // pred_check_branch
          %147 = sbr.rel (%p145) target = $region28
        $region27: #{tpu_custom_call.1} parent=23 // pred_region
          %p148 = scmp.lt.s32.totalorder %s19, 1
          %s149 = scalar_select %p148, %s19, 1
          %s150 = smul.addr %s149, 4
          %s151 = smul.addr %s150, 4
          %s152 = scalar_lea.vmem %s0, %s151
        $region28: #{tpu_custom_call.1} parent=23 // pred_fallthru
          _
      $region24: #{tpu_custom_call.1} parent=5 // pred_fallthru
        _
      %p153 = scmp.le.s32.totalorder 1, %s12
      %p154 = scmp.lt.s32.totalorder %s12, 3
      %p155 = pnand %p153, %p154
      %p156 = pneg %p155
      // Predicated region
      $region29: #{tpu_custom_call.1} parent=5 // pred_check
        _
      $region30: #{tpu_custom_call.1} parent=5 // pred_check_branch
        %158 = sbr.rel (%p155) target = $region32
      $region31: #{tpu_custom_call.1} parent=5 // pred_region
        %s159 = ssub.s32 %s12, 1
        %p160 = scmp.lt.s32.totalorder %s21, 1
        %s161 = scalar_select %p160, %s21, 1
        %s162 = smul.addr %s161, 4
        %s163 = smul.addr %s162, 4
        %s164 = scalar_lea.vmem %s0, %s163
        %p165 = pneg %p50
        %p166 = pneg %p47
        %p167 = pneg %p71
        %p168 = pneg %p68
        %p169 = pneg %p92
        %p170 = pneg %p89
        %p171 = pneg %p120
        %p172 = pneg %p117
        %s173 = sand.u32 %s107, 1
        %s174 = scalar_lea.sflag [#allocation3], %s173
        %s175 = sand.u32 %s107, 1
        %s176 = smul.addr %s175, 24
        %s177 = scalar_lea.vmem [#allocation2], %s176
        %p178 = scmp.lt.s32.totalorder %s21, 1
        %s179 = scalar_select %p178, %s21, 1
        %s180 = smul.addr %s179, 4
        %s181 = smul.addr %s180, 4
        %s182 = scalar_lea.vmem %s0, %s181
        %s183 = smul.u32 3, %s22
        %v184 = vld [vmem:[%s182] sm:$0xff]
        %v185 = vld [vmem:[%s182 + $0x8] sm:$0xf]
        %v186 = vld [vmem:[%s1] sm:$0xff]
        %v187 = vld [vmem:[%s182 + $0x8] sm:$0xff]
        %s188 = scalar_lea.vmem %s1, 8
        %v189 = vld [vmem:[%s188] sm:$0xff]
        %v192 = vcombine.high %v184, %v184
        %v193 = vcombine.high %v187, %v187
        %194 = vrot.lane.b32.xlu0 %v184, 127
        %v195 = vpop.permute.xlu0 %194
        %196 = vrot.lane.b32.xlu0 %v192, 127
        %v197 = vpop.permute.xlu0 %196
        %198 = vrot.lane.b32.xlu0 %v187, 127
        %v199 = vpop.permute.xlu0 %198
        %200 = vrot.lane.b32.xlu0 %v193, 127
        %v201 = vpop.permute.xlu0 %200
        %vm202 = vcmask 1039360
        %v203 = vsel %vm202, %v195, %v197
        %v204 = vsel %vm202, %v197, %v199
        %v205 = vsel %vm202, %v199, %v201
        %vm206 = vcmask 31744
        %v208 = vsel %vm206, %v189, 0
        %vm210 = vcmask 1043456
        %v211 = vsel %vm210, %v203, 0
        %v213 = vsel %vm210, %v204, 0
        %v215 = vsel %vm210, %v205, 0
        %217 = vmatprep.subr.mxu0 0.0
        %218 = vmatpush1.msra.mxu0 0.0
        %219 = vmatprep.subr.mxu0 0.0
        %220 = vmatpush1.msra.mxu0 0.0
        %221 = vmatprep.subr.mxu0 0.0
        %222 = vmatpush1.msra.mxu0 0.0
        %223 = vmatprep.subr.mxu0 0.0
        %224 = vmatpush1.msra.mxu0 0.0
        %225 = vmatprep.subr.mxu0 0.0
        %226 = vmatpush1.msra.mxu0 0.0
        %227 = vmatprep.subr.mxu0 0.0
        %228 = vmatpush1.msra.mxu0 0.0
        %229 = vmatprep.subr.mxu0 0.0
        %230 = vmatpush1.msra.mxu0 0.0
        %231 = vmatprep.subr.mxu0 0.0
        %232 = vmatpush1.msra.mxu0 0.0
        %233 = vmatprep.subr.mxu0 0.0
        %234 = vmatpush1.msra.mxu0 0.0
        %235 = vmatprep.subr.mxu0 0.0
        %236 = vmatpush1.msra.mxu0 0.0
        %237 = vmatprep.subr.mxu0 0.0
        %238 = vmatpush1.msra.mxu0 0.0
        %239 = vmatprep.subr.mxu0 0.0
        %240 = vmatpush1.msra.mxu0 0.0
        %241 = vmatprep.subr.mxu0 0.0
        %242 = vmatpush1.msra.mxu0 0.0
        %243 = vmatprep.subr.mxu0 0.0
        %244 = vmatpush1.msra.mxu0 0.0
        %245 = vmatprep.subr.mxu0 0.0
        %246 = vmatpush1.msra.mxu0 0.0
        %247 = vmatprep.subr.mxu0 %v213
        %248 = vmatpush1.msra.mxu0 %v211
        %249 = vmatprep.subr.mxu0 0.0
        %250 = vmatpush2.msra.mxu0 0.0
        %251 = vmatprep.subr.mxu0 0.0
        %252 = vmatpush2.msra.mxu0 0.0
        %253 = vmatprep.subr.mxu0 0.0
        %254 = vmatpush2.msra.mxu0 0.0
        %255 = vmatprep.subr.mxu0 0.0
        %256 = vmatpush2.msra.mxu0 0.0
        %257 = vmatprep.subr.mxu0 0.0
        %258 = vmatpush2.msra.mxu0 0.0
        %259 = vmatprep.subr.mxu0 0.0
        %260 = vmatpush2.msra.mxu0 0.0
        %261 = vmatprep.subr.mxu0 0.0
        %262 = vmatpush2.msra.mxu0 0.0
        %263 = vmatprep.subr.mxu0 0.0
        %264 = vmatpush2.msra.mxu0 0.0
        %265 = vmatprep.subr.mxu0 0.0
        %266 = vmatpush2.msra.mxu0 0.0
        %267 = vmatprep.subr.mxu0 0.0
        %268 = vmatpush2.msra.mxu0 0.0
        %269 = vmatprep.subr.mxu0 0.0
        %270 = vmatpush2.msra.mxu0 0.0
        %271 = vmatprep.subr.mxu0 0.0
        %272 = vmatpush2.msra.mxu0 0.0
        %273 = vmatprep.subr.mxu0 0.0
        %274 = vmatpush2.msra.mxu0 0.0
        %275 = vmatprep.subr.mxu0 0.0
        %276 = vmatpush2.msra.mxu0 0.0
        %277 = vmatprep.subr.mxu0 0.0
        %278 = vmatpush2.msra.mxu0 0.0
        %279 = vmatprep.subr.mxu0 0.0
        %280 = vmatpush2.msra.mxu0 0.0
        %281 = vmatprep.mubr.f32.mxu0 0.0
        %282 = vmatmul.mubr.f32.gmra.mxu0 %v208
        %v283 = vpop.f32.mrf.mxu0
        %v284 = vadd.f32 0.0, %v283
        %v285 = vpop.f32.mrf.mxu0
        %v286 = vadd.f32 0.0, %v285
        %287 = vdwg.mxu0
        %288 = vmatprep.subr.mxu0 0.0
        %289 = vmatpush1.msra.mxu0 0.0
        %290 = vmatprep.subr.mxu0 0.0
        %291 = vmatpush1.msra.mxu0 0.0
        %292 = vmatprep.subr.mxu0 0.0
        %293 = vmatpush1.msra.mxu0 0.0
        %294 = vmatprep.subr.mxu0 0.0
        %295 = vmatpush1.msra.mxu0 0.0
        %296 = vmatprep.subr.mxu0 0.0
        %297 = vmatpush1.msra.mxu0 0.0
        %298 = vmatprep.subr.mxu0 0.0
        %299 = vmatpush1.msra.mxu0 0.0
        %300 = vmatprep.subr.mxu0 0.0
        %301 = vmatpush1.msra.mxu0 0.0
        %302 = vmatprep.subr.mxu0 0.0
        %303 = vmatpush1.msra.mxu0 0.0
        %304 = vmatprep.subr.mxu0 0.0
        %305 = vmatpush1.msra.mxu0 0.0
        %306 = vmatprep.subr.mxu0 0.0
        %307 = vmatpush1.msra.mxu0 0.0
        %308 = vmatprep.subr.mxu0 0.0
        %309 = vmatpush1.msra.mxu0 0.0
        %310 = vmatprep.subr.mxu0 0.0
        %311 = vmatpush1.msra.mxu0 0.0
        %312 = vmatprep.subr.mxu0 0.0
        %313 = vmatpush1.msra.mxu0 0.0
        %314 = vmatprep.subr.mxu0 0.0
        %315 = vmatpush1.msra.mxu0 0.0
        %316 = vmatprep.subr.mxu0 0.0
        %317 = vmatpush1.msra.mxu0 0.0
        %318 = vmatprep.subr.mxu0 0.0
        %319 = vmatpush1.msra.mxu0 %v215
        %320 = vmatprep.subr.mxu0 0.0
        %321 = vmatpush2.msra.mxu0 0.0
        %322 = vmatprep.subr.mxu0 0.0
        %323 = vmatpush2.msra.mxu0 0.0
        %324 = vmatprep.subr.mxu0 0.0
        %325 = vmatpush2.msra.mxu0 0.0
        %326 = vmatprep.subr.mxu0 0.0
        %327 = vmatpush2.msra.mxu0 0.0
        %328 = vmatprep.subr.mxu0 0.0
        %329 = vmatpush2.msra.mxu0 0.0
        %330 = vmatprep.subr.mxu0 0.0
        %331 = vmatpush2.msra.mxu0 0.0
        %332 = vmatprep.subr.mxu0 0.0
        %333 = vmatpush2.msra.mxu0 0.0
        %334 = vmatprep.subr.mxu0 0.0
        %335 = vmatpush2.msra.mxu0 0.0
        %336 = vmatprep.subr.mxu0 0.0
        %337 = vmatpush2.msra.mxu0 0.0
        %338 = vmatprep.subr.mxu0 0.0
        %339 = vmatpush2.msra.mxu0 0.0
        %340 = vmatprep.subr.mxu0 0.0
        %341 = vmatpush2.msra.mxu0 0.0
        %342 = vmatprep.subr.mxu0 0.0
        %343 = vmatpush2.msra.mxu0 0.0
        %344 = vmatprep.subr.mxu0 0.0
        %345 = vmatpush2.msra.mxu0 0.0
        %346 = vmatprep.subr.mxu0 0.0
        %347 = vmatpush2.msra.mxu0 0.0
        %348 = vmatprep.subr.mxu0 0.0
        %349 = vmatpush2.msra.mxu0 0.0
        %350 = vmatprep.subr.mxu0 0.0
        %351 = vmatpush2.msra.mxu0 0.0
        %352 = vmatprep.mubr.f32.mxu0 0.0
        %353 = vmatmul.mubr.f32.gmra.mxu0 %v208
        %v354 = vpop.f32.mrf.mxu0
        %v355 = vadd.f32 0.0, %v354
        %v356 = vpop.f32.mrf.mxu0
        %357 = vdwg.mxu0
        %v360 = vsel %vm206, %v186, 0
        %v362 = vsel %vm210, %v184, 0
        %v364 = vsel %vm210, %v192, 0
        %v366 = vsel %vm210, %v185, 0
        %368 = vmatprep.subr.mxu0 0.0
        %369 = vmatpush1.msra.mxu0 0.0
        %370 = vmatprep.subr.mxu0 0.0
        %371 = vmatpush1.msra.mxu0 0.0
        %372 = vmatprep.subr.mxu0 0.0
        %373 = vmatpush1.msra.mxu0 0.0
        %374 = vmatprep.subr.mxu0 0.0
        %375 = vmatpush1.msra.mxu0 0.0
        %376 = vmatprep.subr.mxu0 0.0
        %377 = vmatpush1.msra.mxu0 0.0
        %378 = vmatprep.subr.mxu0 0.0
        %379 = vmatpush1.msra.mxu0 0.0
        %380 = vmatprep.subr.mxu0 0.0
        %381 = vmatpush1.msra.mxu0 0.0
        %382 = vmatprep.subr.mxu0 0.0
        %383 = vmatpush1.msra.mxu0 0.0
        %384 = vmatprep.subr.mxu0 0.0
        %385 = vmatpush1.msra.mxu0 0.0
        %386 = vmatprep.subr.mxu0 0.0
        %387 = vmatpush1.msra.mxu0 0.0
        %388 = vmatprep.subr.mxu0 0.0
        %389 = vmatpush1.msra.mxu0 0.0
        %390 = vmatprep.subr.mxu0 0.0
        %391 = vmatpush1.msra.mxu0 0.0
        %392 = vmatprep.subr.mxu0 0.0
        %393 = vmatpush1.msra.mxu0 0.0
        %394 = vmatprep.subr.mxu0 0.0
        %395 = vmatpush1.msra.mxu0 0.0
        %396 = vmatprep.subr.mxu0 0.0
        %397 = vmatpush1.msra.mxu0 0.0
        %398 = vmatprep.subr.mxu0 %v364
        %399 = vmatpush1.msra.mxu0 %v362
        %400 = vmatprep.subr.mxu0 0.0
        %401 = vmatpush2.msra.mxu0 0.0
        %402 = vmatprep.subr.mxu0 0.0
        %403 = vmatpush2.msra.mxu0 0.0
        %404 = vmatprep.subr.mxu0 0.0
        %405 = vmatpush2.msra.mxu0 0.0
        %406 = vmatprep.subr.mxu0 0.0
        %407 = vmatpush2.msra.mxu0 0.0
        %408 = vmatprep.subr.mxu0 0.0
        %409 = vmatpush2.msra.mxu0 0.0
        %410 = vmatprep.subr.mxu0 0.0
        %411 = vmatpush2.msra.mxu0 0.0
        %412 = vmatprep.subr.mxu0 0.0
        %413 = vmatpush2.msra.mxu0 0.0
        %414 = vmatprep.subr.mxu0 0.0
        %415 = vmatpush2.msra.mxu0 0.0
        %416 = vmatprep.subr.mxu0 0.0
        %417 = vmatpush2.msra.mxu0 0.0
        %418 = vmatprep.subr.mxu0 0.0
        %419 = vmatpush2.msra.mxu0 0.0
        %420 = vmatprep.subr.mxu0 0.0
        %421 = vmatpush2.msra.mxu0 0.0
        %422 = vmatprep.subr.mxu0 0.0
        %423 = vmatpush2.msra.mxu0 0.0
        %424 = vmatprep.subr.mxu0 0.0
        %425 = vmatpush2.msra.mxu0 0.0
        %426 = vmatprep.subr.mxu0 0.0
        %427 = vmatpush2.msra.mxu0 0.0
        %428 = vmatprep.subr.mxu0 0.0
        %429 = vmatpush2.msra.mxu0 0.0
        %430 = vmatprep.subr.mxu0 0.0
        %431 = vmatpush2.msra.mxu0 0.0
        %432 = vmatprep.mubr.f32.mxu0 0.0
        %433 = vmatmul.mubr.f32.gmra.mxu0 %v360
        %v434 = vpop.f32.mrf.mxu0
        %v435 = vadd.f32 %v284, %v434
        %v436 = vpop.f32.mrf.mxu0
        %v437 = vadd.f32 %v286, %v436
        %438 = vdwg.mxu0
        %439 = vmatprep.subr.mxu0 0.0
        %440 = vmatpush1.msra.mxu0 0.0
        %441 = vmatprep.subr.mxu0 0.0
        %442 = vmatpush1.msra.mxu0 0.0
        %443 = vmatprep.subr.mxu0 0.0
        %444 = vmatpush1.msra.mxu0 0.0
        %445 = vmatprep.subr.mxu0 0.0
        %446 = vmatpush1.msra.mxu0 0.0
        %447 = vmatprep.subr.mxu0 0.0
        %448 = vmatpush1.msra.mxu0 0.0
        %449 = vmatprep.subr.mxu0 0.0
        %450 = vmatpush1.msra.mxu0 0.0
        %451 = vmatprep.subr.mxu0 0.0
        %452 = vmatpush1.msra.mxu0 0.0
        %453 = vmatprep.subr.mxu0 0.0
        %454 = vmatpush1.msra.mxu0 0.0
        %455 = vmatprep.subr.mxu0 0.0
        %456 = vmatpush1.msra.mxu0 0.0
        %457 = vmatprep.subr.mxu0 0.0
        %458 = vmatpush1.msra.mxu0 0.0
        %459 = vmatprep.subr.mxu0 0.0
        %460 = vmatpush1.msra.mxu0 0.0
        %461 = vmatprep.subr.mxu0 0.0
        %462 = vmatpush1.msra.mxu0 0.0
        %463 = vmatprep.subr.mxu0 0.0
        %464 = vmatpush1.msra.mxu0 0.0
        %465 = vmatprep.subr.mxu0 0.0
        %466 = vmatpush1.msra.mxu0 0.0
        %467 = vmatprep.subr.mxu0 0.0
        %468 = vmatpush1.msra.mxu0 0.0
        %469 = vmatprep.subr.mxu0 0.0
        %470 = vmatpush1.msra.mxu0 %v366
        %471 = vmatprep.subr.mxu0 0.0
        %472 = vmatpush2.msra.mxu0 0.0
        %473 = vmatprep.subr.mxu0 0.0
        %474 = vmatpush2.msra.mxu0 0.0
        %475 = vmatprep.subr.mxu0 0.0
        %476 = vmatpush2.msra.mxu0 0.0
        %477 = vmatprep.subr.mxu0 0.0
        %478 = vmatpush2.msra.mxu0 0.0
        %479 = vmatprep.subr.mxu0 0.0
        %480 = vmatpush2.msra.mxu0 0.0
        %481 = vmatprep.subr.mxu0 0.0
        %482 = vmatpush2.msra.mxu0 0.0
        %483 = vmatprep.subr.mxu0 0.0
        %484 = vmatpush2.msra.mxu0 0.0
        %485 = vmatprep.subr.mxu0 0.0
        %486 = vmatpush2.msra.mxu0 0.0
        %487 = vmatprep.subr.mxu0 0.0
        %488 = vmatpush2.msra.mxu0 0.0
        %489 = vmatprep.subr.mxu0 0.0
        %490 = vmatpush2.msra.mxu0 0.0
        %491 = vmatprep.subr.mxu0 0.0
        %492 = vmatpush2.msra.mxu0 0.0
        %493 = vmatprep.subr.mxu0 0.0
        %494 = vmatpush2.msra.mxu0 0.0
        %495 = vmatprep.subr.mxu0 0.0
        %496 = vmatpush2.msra.mxu0 0.0
        %497 = vmatprep.subr.mxu0 0.0
        %498 = vmatpush2.msra.mxu0 0.0
        %499 = vmatprep.subr.mxu0 0.0
        %500 = vmatpush2.msra.mxu0 0.0
        %501 = vmatprep.subr.mxu0 0.0
        %502 = vmatpush2.msra.mxu0 0.0
        %503 = vmatprep.mubr.f32.mxu0 0.0
        %504 = vmatmul.mubr.f32.gmra.mxu0 %v360
        %v505 = vpop.f32.mrf.mxu0
        %v506 = vadd.f32 %v355, %v505
        %v507 = vpop.f32.mrf.mxu0
        %508 = vdwg.mxu0
        %v509 = vld [vmem:[%s182] sm:$0xff]
        %v510 = vld [vmem:[%s182 + $0x8] sm:$0xff]
        %s511 = scalar_lea.vmem %s1, 16
        %v512 = vld [vmem:[%s511] sm:$0xff]
        %v515 = vcombine.high %v509, %v509
        %v516 = vcombine.high %v510, %v510
        %517 = vrot.lane.b32.xlu0 %v509, 126
        %v518 = vpop.permute.xlu0 %517
        %519 = vrot.lane.b32.xlu0 %v515, 126
        %v520 = vpop.permute.xlu0 %519
        %521 = vrot.lane.b32.xlu0 %v510, 126
        %v522 = vpop.permute.xlu0 %521
        %523 = vrot.lane.b32.xlu0 %v516, 126
        %v524 = vpop.permute.xlu0 %523
        %vm525 = vcmask 1031168
        %v526 = vsel %vm525, %v518, %v520
        %v527 = vsel %vm525, %v520, %v522
        %v528 = vsel %vm525, %v522, %v524
        %v530 = vsel %vm206, %v512, 0
        %v532 = vsel %vm210, %v526, 0
        %v534 = vsel %vm210, %v527, 0
        %v536 = vsel %vm210, %v528, 0
        %538 = vmatprep.subr.mxu0 0.0
        %539 = vmatpush1.msra.mxu0 0.0
        %540 = vmatprep.subr.mxu0 0.0
        %541 = vmatpush1.msra.mxu0 0.0
        %542 = vmatprep.subr.mxu0 0.0
        %543 = vmatpush1.msra.mxu0 0.0
        %544 = vmatprep.subr.mxu0 0.0
        %545 = vmatpush1.msra.mxu0 0.0
        %546 = vmatprep.subr.mxu0 0.0
        %547 = vmatpush1.msra.mxu0 0.0
        %548 = vmatprep.subr.mxu0 0.0
        %549 = vmatpush1.msra.mxu0 0.0
        %550 = vmatprep.subr.mxu0 0.0
        %551 = vmatpush1.msra.mxu0 0.0
        %552 = vmatprep.subr.mxu0 0.0
        %553 = vmatpush1.msra.mxu0 0.0
        %554 = vmatprep.subr.mxu0 0.0
        %555 = vmatpush1.msra.mxu0 0.0
        %556 = vmatprep.subr.mxu0 0.0
        %557 = vmatpush1.msra.mxu0 0.0
        %558 = vmatprep.subr.mxu0 0.0
        %559 = vmatpush1.msra.mxu0 0.0
        %560 = vmatprep.subr.mxu0 0.0
        %561 = vmatpush1.msra.mxu0 0.0
        %562 = vmatprep.subr.mxu0 0.0
        %563 = vmatpush1.msra.mxu0 0.0
        %564 = vmatprep.subr.mxu0 0.0
        %565 = vmatpush1.msra.mxu0 0.0
        %566 = vmatprep.subr.mxu0 0.0
        %567 = vmatpush1.msra.mxu0 0.0
        %568 = vmatprep.subr.mxu0 %v534
        %569 = vmatpush1.msra.mxu0 %v532
        %570 = vmatprep.subr.mxu0 0.0
        %571 = vmatpush2.msra.mxu0 0.0
        %572 = vmatprep.subr.mxu0 0.0
        %573 = vmatpush2.msra.mxu0 0.0
        %574 = vmatprep.subr.mxu0 0.0
        %575 = vmatpush2.msra.mxu0 0.0
        %576 = vmatprep.subr.mxu0 0.0
        %577 = vmatpush2.msra.mxu0 0.0
        %578 = vmatprep.subr.mxu0 0.0
        %579 = vmatpush2.msra.mxu0 0.0
        %580 = vmatprep.subr.mxu0 0.0
        %581 = vmatpush2.msra.mxu0 0.0
        %582 = vmatprep.subr.mxu0 0.0
        %583 = vmatpush2.msra.mxu0 0.0
        %584 = vmatprep.subr.mxu0 0.0
        %585 = vmatpush2.msra.mxu0 0.0
        %586 = vmatprep.subr.mxu0 0.0
        %587 = vmatpush2.msra.mxu0 0.0
        %588 = vmatprep.subr.mxu0 0.0
        %589 = vmatpush2.msra.mxu0 0.0
        %590 = vmatprep.subr.mxu0 0.0
        %591 = vmatpush2.msra.mxu0 0.0
        %592 = vmatprep.subr.mxu0 0.0
        %593 = vmatpush2.msra.mxu0 0.0
        %594 = vmatprep.subr.mxu0 0.0
        %595 = vmatpush2.msra.mxu0 0.0
        %596 = vmatprep.subr.mxu0 0.0
        %597 = vmatpush2.msra.mxu0 0.0
        %598 = vmatprep.subr.mxu0 0.0
        %599 = vmatpush2.msra.mxu0 0.0
        %600 = vmatprep.subr.mxu0 0.0
        %601 = vmatpush2.msra.mxu0 0.0
        %602 = vmatprep.mubr.f32.mxu0 0.0
        %603 = vmatmul.mubr.f32.gmra.mxu0 %v530
        %v604 = vpop.f32.mrf.mxu0
        %v605 = vadd.f32 0.0, %v604
        %v606 = vpop.f32.mrf.mxu0
        %v607 = vadd.f32 0.0, %v606
        %608 = vdwg.mxu0
        %609 = vmatprep.subr.mxu0 0.0
        %610 = vmatpush1.msra.mxu0 0.0
        %611 = vmatprep.subr.mxu0 0.0
        %612 = vmatpush1.msra.mxu0 0.0
        %613 = vmatprep.subr.mxu0 0.0
        %614 = vmatpush1.msra.mxu0 0.0
        %615 = vmatprep.subr.mxu0 0.0
        %616 = vmatpush1.msra.mxu0 0.0
        %617 = vmatprep.subr.mxu0 0.0
        %618 = vmatpush1.msra.mxu0 0.0
        %619 = vmatprep.subr.mxu0 0.0
        %620 = vmatpush1.msra.mxu0 0.0
        %621 = vmatprep.subr.mxu0 0.0
        %622 = vmatpush1.msra.mxu0 0.0
        %623 = vmatprep.subr.mxu0 0.0
        %624 = vmatpush1.msra.mxu0 0.0
        %625 = vmatprep.subr.mxu0 0.0
        %626 = vmatpush1.msra.mxu0 0.0
        %627 = vmatprep.subr.mxu0 0.0
        %628 = vmatpush1.msra.mxu0 0.0
        %629 = vmatprep.subr.mxu0 0.0
        %630 = vmatpush1.msra.mxu0 0.0
        %631 = vmatprep.subr.mxu0 0.0
        %632 = vmatpush1.msra.mxu0 0.0
        %633 = vmatprep.subr.mxu0 0.0
        %634 = vmatpush1.msra.mxu0 0.0
        %635 = vmatprep.subr.mxu0 0.0
        %636 = vmatpush1.msra.mxu0 0.0
        %637 = vmatprep.subr.mxu0 0.0
        %638 = vmatpush1.msra.mxu0 0.0
        %639 = vmatprep.subr.mxu0 0.0
        %640 = vmatpush1.msra.mxu0 %v536
        %641 = vmatprep.subr.mxu0 0.0
        %642 = vmatpush2.msra.mxu0 0.0
        %643 = vmatprep.subr.mxu0 0.0
        %644 = vmatpush2.msra.mxu0 0.0
        %645 = vmatprep.subr.mxu0 0.0
        %646 = vmatpush2.msra.mxu0 0.0
        %647 = vmatprep.subr.mxu0 0.0
        %648 = vmatpush2.msra.mxu0 0.0
        %649 = vmatprep.subr.mxu0 0.0
        %650 = vmatpush2.msra.mxu0 0.0
        %651 = vmatprep.subr.mxu0 0.0
        %652 = vmatpush2.msra.mxu0 0.0
        %653 = vmatprep.subr.mxu0 0.0
        %654 = vmatpush2.msra.mxu0 0.0
        %655 = vmatprep.subr.mxu0 0.0
        %656 = vmatpush2.msra.mxu0 0.0
        %657 = vmatprep.subr.mxu0 0.0
        %658 = vmatpush2.msra.mxu0 0.0
        %659 = vmatprep.subr.mxu0 0.0
        %660 = vmatpush2.msra.mxu0 0.0
        %661 = vmatprep.subr.mxu0 0.0
        %662 = vmatpush2.msra.mxu0 0.0
        %663 = vmatprep.subr.mxu0 0.0
        %664 = vmatpush2.msra.mxu0 0.0
        %665 = vmatprep.subr.mxu0 0.0
        %666 = vmatpush2.msra.mxu0 0.0
        %667 = vmatprep.subr.mxu0 0.0
        %668 = vmatpush2.msra.mxu0 0.0
        %669 = vmatprep.subr.mxu0 0.0
        %670 = vmatpush2.msra.mxu0 0.0
        %671 = vmatprep.subr.mxu0 0.0
        %672 = vmatpush2.msra.mxu0 0.0
        %673 = vmatprep.mubr.f32.mxu0 0.0
        %674 = vmatmul.mubr.f32.gmra.mxu0 %v530
        %v675 = vpop.f32.mrf.mxu0
        %v676 = vadd.f32 0.0, %v675
        %v677 = vpop.f32.mrf.mxu0
        %678 = vdwg.mxu0
        %v679 = vadd.f32 %v435, %v605
        %v680 = vadd.f32 %v437, %v607
        %v681 = vadd.f32 %v506, %v676
        %v682 = vld [vmem:[%s182] sm:$0xff]
        %v683 = vld [vmem:[%s182 + $0x8] sm:$0xff]
        %s684 = scalar_lea.vmem %s1, 24
        %v685 = vld [vmem:[%s684] sm:$0xff]
        %v688 = vcombine.high %v682, %v682
        %v689 = vcombine.high %v683, %v683
        %690 = vrot.lane.b32.xlu0 %v682, 110
        %v691 = vpop.permute.xlu0 %690
        %692 = vrot.lane.b32.xlu0 %v688, 110
        %v693 = vpop.permute.xlu0 %692
        %694 = vrot.lane.b32.xlu0 %v683, 110
        %v695 = vpop.permute.xlu0 %694
        %696 = vrot.lane.b32.xlu0 %v689, 110
        %v697 = vpop.permute.xlu0 %696
        %vm698 = vcmask 900096
        %v699 = vsel %vm698, %v691, %v693
        %v700 = vsel %vm698, %v693, %v695
        %v701 = vsel %vm698, %v695, %v697
        %v703 = vsel %vm206, %v685, 0
        %v705 = vsel %vm210, %v699, 0
        %v707 = vsel %vm210, %v700, 0
        %v709 = vsel %vm210, %v701, 0
        %711 = vmatprep.subr.mxu0 0.0
        %712 = vmatpush1.msra.mxu0 0.0
        %713 = vmatprep.subr.mxu0 0.0
        %714 = vmatpush1.msra.mxu0 0.0
        %715 = vmatprep.subr.mxu0 0.0
        %716 = vmatpush1.msra.mxu0 0.0
        %717 = vmatprep.subr.mxu0 0.0
        %718 = vmatpush1.msra.mxu0 0.0
        %719 = vmatprep.subr.mxu0 0.0
        %720 = vmatpush1.msra.mxu0 0.0
        %721 = vmatprep.subr.mxu0 0.0
        %722 = vmatpush1.msra.mxu0 0.0
        %723 = vmatprep.subr.mxu0 0.0
        %724 = vmatpush1.msra.mxu0 0.0
        %725 = vmatprep.subr.mxu0 0.0
        %726 = vmatpush1.msra.mxu0 0.0
        %727 = vmatprep.subr.mxu0 0.0
        %728 = vmatpush1.msra.mxu0 0.0
        %729 = vmatprep.subr.mxu0 0.0
        %730 = vmatpush1.msra.mxu0 0.0
        %731 = vmatprep.subr.mxu0 0.0
        %732 = vmatpush1.msra.mxu0 0.0
        %733 = vmatprep.subr.mxu0 0.0
        %734 = vmatpush1.msra.mxu0 0.0
        %735 = vmatprep.subr.mxu0 0.0
        %736 = vmatpush1.msra.mxu0 0.0
        %737 = vmatprep.subr.mxu0 0.0
        %738 = vmatpush1.msra.mxu0 0.0
        %739 = vmatprep.subr.mxu0 0.0
        %740 = vmatpush1.msra.mxu0 0.0
        %741 = vmatprep.subr.mxu0 %v707
        %742 = vmatpush1.msra.mxu0 %v705
        %743 = vmatprep.subr.mxu0 0.0
        %744 = vmatpush2.msra.mxu0 0.0
        %745 = vmatprep.subr.mxu0 0.0
        %746 = vmatpush2.msra.mxu0 0.0
        %747 = vmatprep.subr.mxu0 0.0
        %748 = vmatpush2.msra.mxu0 0.0
        %749 = vmatprep.subr.mxu0 0.0
        %750 = vmatpush2.msra.mxu0 0.0
        %751 = vmatprep.subr.mxu0 0.0
        %752 = vmatpush2.msra.mxu0 0.0
        %753 = vmatprep.subr.mxu0 0.0
        %754 = vmatpush2.msra.mxu0 0.0
        %755 = vmatprep.subr.mxu0 0.0
        %756 = vmatpush2.msra.mxu0 0.0
        %757 = vmatprep.subr.mxu0 0.0
        %758 = vmatpush2.msra.mxu0 0.0
        %759 = vmatprep.subr.mxu0 0.0
        %760 = vmatpush2.msra.mxu0 0.0
        %761 = vmatprep.subr.mxu0 0.0
        %762 = vmatpush2.msra.mxu0 0.0
        %763 = vmatprep.subr.mxu0 0.0
        %764 = vmatpush2.msra.mxu0 0.0
        %765 = vmatprep.subr.mxu0 0.0
        %766 = vmatpush2.msra.mxu0 0.0
        %767 = vmatprep.subr.mxu0 0.0
        %768 = vmatpush2.msra.mxu0 0.0
        %769 = vmatprep.subr.mxu0 0.0
        %770 = vmatpush2.msra.mxu0 0.0
        %771 = vmatprep.subr.mxu0 0.0
        %772 = vmatpush2.msra.mxu0 0.0
        %773 = vmatprep.subr.mxu0 0.0
        %774 = vmatpush2.msra.mxu0 0.0
        %775 = vmatprep.mubr.f32.mxu0 0.0
        %776 = vmatmul.mubr.f32.gmra.mxu0 %v703
        %v777 = vpop.f32.mrf.mxu0
        %v778 = vadd.f32 0.0, %v777
        %v779 = vpop.f32.mrf.mxu0
        %v780 = vadd.f32 0.0, %v779
        %781 = vdwg.mxu0
        %782 = vmatprep.subr.mxu0 0.0
        %783 = vmatpush1.msra.mxu0 0.0
        %784 = vmatprep.subr.mxu0 0.0
        %785 = vmatpush1.msra.mxu0 0.0
        %786 = vmatprep.subr.mxu0 0.0
        %787 = vmatpush1.msra.mxu0 0.0
        %788 = vmatprep.subr.mxu0 0.0
        %789 = vmatpush1.msra.mxu0 0.0
        %790 = vmatprep.subr.mxu0 0.0
        %791 = vmatpush1.msra.mxu0 0.0
        %792 = vmatprep.subr.mxu0 0.0
        %793 = vmatpush1.msra.mxu0 0.0
        %794 = vmatprep.subr.mxu0 0.0
        %795 = vmatpush1.msra.mxu0 0.0
        %796 = vmatprep.subr.mxu0 0.0
        %797 = vmatpush1.msra.mxu0 0.0
        %798 = vmatprep.subr.mxu0 0.0
        %799 = vmatpush1.msra.mxu0 0.0
        %800 = vmatprep.subr.mxu0 0.0
        %801 = vmatpush1.msra.mxu0 0.0
        %802 = vmatprep.subr.mxu0 0.0
        %803 = vmatpush1.msra.mxu0 0.0
        %804 = vmatprep.subr.mxu0 0.0
        %805 = vmatpush1.msra.mxu0 0.0
        %806 = vmatprep.subr.mxu0 0.0
        %807 = vmatpush1.msra.mxu0 0.0
        %808 = vmatprep.subr.mxu0 0.0
        %809 = vmatpush1.msra.mxu0 0.0
        %810 = vmatprep.subr.mxu0 0.0
        %811 = vmatpush1.msra.mxu0 0.0
        %812 = vmatprep.subr.mxu0 0.0
        %813 = vmatpush1.msra.mxu0 %v709
        %814 = vmatprep.subr.mxu0 0.0
        %815 = vmatpush2.msra.mxu0 0.0
        %816 = vmatprep.subr.mxu0 0.0
        %817 = vmatpush2.msra.mxu0 0.0
        %818 = vmatprep.subr.mxu0 0.0
        %819 = vmatpush2.msra.mxu0 0.0
        %820 = vmatprep.subr.mxu0 0.0
        %821 = vmatpush2.msra.mxu0 0.0
        %822 = vmatprep.subr.mxu0 0.0
        %823 = vmatpush2.msra.mxu0 0.0
        %824 = vmatprep.subr.mxu0 0.0
        %825 = vmatpush2.msra.mxu0 0.0
        %826 = vmatprep.subr.mxu0 0.0
        %827 = vmatpush2.msra.mxu0 0.0
        %828 = vmatprep.subr.mxu0 0.0
        %829 = vmatpush2.msra.mxu0 0.0
        %830 = vmatprep.subr.mxu0 0.0
        %831 = vmatpush2.msra.mxu0 0.0
        %832 = vmatprep.subr.mxu0 0.0
        %833 = vmatpush2.msra.mxu0 0.0
        %834 = vmatprep.subr.mxu0 0.0
        %835 = vmatpush2.msra.mxu0 0.0
        %836 = vmatprep.subr.mxu0 0.0
        %837 = vmatpush2.msra.mxu0 0.0
        %838 = vmatprep.subr.mxu0 0.0
        %839 = vmatpush2.msra.mxu0 0.0
        %840 = vmatprep.subr.mxu0 0.0
        %841 = vmatpush2.msra.mxu0 0.0
        %842 = vmatprep.subr.mxu0 0.0
        %843 = vmatpush2.msra.mxu0 0.0
        %844 = vmatprep.subr.mxu0 0.0
        %845 = vmatpush2.msra.mxu0 0.0
        %846 = vmatprep.mubr.f32.mxu0 0.0
        %847 = vmatmul.mubr.f32.gmra.mxu0 %v703
        %v848 = vpop.f32.mrf.mxu0
        %v849 = vadd.f32 0.0, %v848
        %v850 = vpop.f32.mrf.mxu0
        %851 = vdwg.mxu0
        %v852 = vadd.f32 %v679, %v778
        %v853 = vadd.f32 %v680, %v780
        %v854 = vadd.f32 %v681, %v849
        %v855 = vld [vmem:[%s182] sm:$0xff]
        %v856 = vld [vmem:[%s182 + $0x8] sm:$0xff]
        %s857 = scalar_lea.vmem %s1, 32
        %v858 = vld [vmem:[%s857] sm:$0xff]
        %v861 = vcombine.high %v855, %v855
        %v862 = vcombine.high %v856, %v856
        %863 = vrot.lane.b32.xlu0 %v855, 109
        %v864 = vpop.permute.xlu0 %863
        %865 = vrot.lane.b32.xlu0 %v861, 109
        %v866 = vpop.permute.xlu0 %865
        %867 = vrot.lane.b32.xlu0 %v856, 109
        %v868 = vpop.permute.xlu0 %867
        %869 = vrot.lane.b32.xlu0 %v862, 109
        %v870 = vpop.permute.xlu0 %869
        %vm871 = vcmask 891904
        %v872 = vsel %vm871, %v864, %v866
        %v873 = vsel %vm871, %v866, %v868
        %v874 = vsel %vm871, %v868, %v870
        %v876 = vsel %vm206, %v858, 0
        %v878 = vsel %vm210, %v872, 0
        %v880 = vsel %vm210, %v873, 0
        %v882 = vsel %vm210, %v874, 0
        %884 = vmatprep.subr.mxu0 0.0
        %885 = vmatpush1.msra.mxu0 0.0
        %886 = vmatprep.subr.mxu0 0.0
        %887 = vmatpush1.msra.mxu0 0.0
        %888 = vmatprep.subr.mxu0 0.0
        %889 = vmatpush1.msra.mxu0 0.0
        %890 = vmatprep.subr.mxu0 0.0
        %891 = vmatpush1.msra.mxu0 0.0
        %892 = vmatprep.subr.mxu0 0.0
        %893 = vmatpush1.msra.mxu0 0.0
        %894 = vmatprep.subr.mxu0 0.0
        %895 = vmatpush1.msra.mxu0 0.0
        %896 = vmatprep.subr.mxu0 0.0
        %897 = vmatpush1.msra.mxu0 0.0
        %898 = vmatprep.subr.mxu0 0.0
        %899 = vmatpush1.msra.mxu0 0.0
        %900 = vmatprep.subr.mxu0 0.0
        %901 = vmatpush1.msra.mxu0 0.0
        %902 = vmatprep.subr.mxu0 0.0
        %903 = vmatpush1.msra.mxu0 0.0
        %904 = vmatprep.subr.mxu0 0.0
        %905 = vmatpush1.msra.mxu0 0.0
        %906 = vmatprep.subr.mxu0 0.0
        %907 = vmatpush1.msra.mxu0 0.0
        %908 = vmatprep.subr.mxu0 0.0
        %909 = vmatpush1.msra.mxu0 0.0
        %910 = vmatprep.subr.mxu0 0.0
        %911 = vmatpush1.msra.mxu0 0.0
        %912 = vmatprep.subr.mxu0 0.0
        %913 = vmatpush1.msra.mxu0 0.0
        %914 = vmatprep.subr.mxu0 %v880
        %915 = vmatpush1.msra.mxu0 %v878
        %916 = vmatprep.subr.mxu0 0.0
        %917 = vmatpush2.msra.mxu0 0.0
        %918 = vmatprep.subr.mxu0 0.0
        %919 = vmatpush2.msra.mxu0 0.0
        %920 = vmatprep.subr.mxu0 0.0
        %921 = vmatpush2.msra.mxu0 0.0
        %922 = vmatprep.subr.mxu0 0.0
        %923 = vmatpush2.msra.mxu0 0.0
        %924 = vmatprep.subr.mxu0 0.0
        %925 = vmatpush2.msra.mxu0 0.0
        %926 = vmatprep.subr.mxu0 0.0
        %927 = vmatpush2.msra.mxu0 0.0
        %928 = vmatprep.subr.mxu0 0.0
        %929 = vmatpush2.msra.mxu0 0.0
        %930 = vmatprep.subr.mxu0 0.0
        %931 = vmatpush2.msra.mxu0 0.0
        %932 = vmatprep.subr.mxu0 0.0
        %933 = vmatpush2.msra.mxu0 0.0
        %934 = vmatprep.subr.mxu0 0.0
        %935 = vmatpush2.msra.mxu0 0.0
        %936 = vmatprep.subr.mxu0 0.0
        %937 = vmatpush2.msra.mxu0 0.0
        %938 = vmatprep.subr.mxu0 0.0
        %939 = vmatpush2.msra.mxu0 0.0
        %940 = vmatprep.subr.mxu0 0.0
        %941 = vmatpush2.msra.mxu0 0.0
        %942 = vmatprep.subr.mxu0 0.0
        %943 = vmatpush2.msra.mxu0 0.0
        %944 = vmatprep.subr.mxu0 0.0
        %945 = vmatpush2.msra.mxu0 0.0
        %946 = vmatprep.subr.mxu0 0.0
        %947 = vmatpush2.msra.mxu0 0.0
        %948 = vmatprep.mubr.f32.mxu0 0.0
        %949 = vmatmul.mubr.f32.gmra.mxu0 %v876
        %v950 = vpop.f32.mrf.mxu0
        %v951 = vadd.f32 0.0, %v950
        %v952 = vpop.f32.mrf.mxu0
        %v953 = vadd.f32 0.0, %v952
        %954 = vdwg.mxu0
        %955 = vmatprep.subr.mxu0 0.0
        %956 = vmatpush1.msra.mxu0 0.0
        %957 = vmatprep.subr.mxu0 0.0
        %958 = vmatpush1.msra.mxu0 0.0
        %959 = vmatprep.subr.mxu0 0.0
        %960 = vmatpush1.msra.mxu0 0.0
        %961 = vmatprep.subr.mxu0 0.0
        %962 = vmatpush1.msra.mxu0 0.0
        %963 = vmatprep.subr.mxu0 0.0
        %964 = vmatpush1.msra.mxu0 0.0
        %965 = vmatprep.subr.mxu0 0.0
        %966 = vmatpush1.msra.mxu0 0.0
        %967 = vmatprep.subr.mxu0 0.0
        %968 = vmatpush1.msra.mxu0 0.0
        %969 = vmatprep.subr.mxu0 0.0
        %970 = vmatpush1.msra.mxu0 0.0
        %971 = vmatprep.subr.mxu0 0.0
        %972 = vmatpush1.msra.mxu0 0.0
        %973 = vmatprep.subr.mxu0 0.0
        %974 = vmatpush1.msra.mxu0 0.0
        %975 = vmatprep.subr.mxu0 0.0
        %976 = vmatpush1.msra.mxu0 0.0
        %977 = vmatprep.subr.mxu0 0.0
        %978 = vmatpush1.msra.mxu0 0.0
        %979 = vmatprep.subr.mxu0 0.0
        %980 = vmatpush1.msra.mxu0 0.0
        %981 = vmatprep.subr.mxu0 0.0
        %982 = vmatpush1.msra.mxu0 0.0
        %983 = vmatprep.subr.mxu0 0.0
        %984 = vmatpush1.msra.mxu0 0.0
        %985 = vmatprep.subr.mxu0 0.0
        %986 = vmatpush1.msra.mxu0 %v882
        %987 = vmatprep.subr.mxu0 0.0
        %988 = vmatpush2.msra.mxu0 0.0
        %989 = vmatprep.subr.mxu0 0.0
        %990 = vmatpush2.msra.mxu0 0.0
        %991 = vmatprep.subr.mxu0 0.0
        %992 = vmatpush2.msra.mxu0 0.0
        %993 = vmatprep.subr.mxu0 0.0
        %994 = vmatpush2.msra.mxu0 0.0
        %995 = vmatprep.subr.mxu0 0.0
        %996 = vmatpush2.msra.mxu0 0.0
        %997 = vmatprep.subr.mxu0 0.0
        %998 = vmatpush2.msra.mxu0 0.0
        %999 = vmatprep.subr.mxu0 0.0
        %1000 = vmatpush2.msra.mxu0 0.0
        %1001 = vmatprep.subr.mxu0 0.0
        %1002 = vmatpush2.msra.mxu0 0.0
        %1003 = vmatprep.subr.mxu0 0.0
        %1004 = vmatpush2.msra.mxu0 0.0
        %1005 = vmatprep.subr.mxu0 0.0
        %1006 = vmatpush2.msra.mxu0 0.0
        %1007 = vmatprep.subr.mxu0 0.0
        %1008 = vmatpush2.msra.mxu0 0.0
        %1009 = vmatprep.subr.mxu0 0.0
        %1010 = vmatpush2.msra.mxu0 0.0
        %1011 = vmatprep.subr.mxu0 0.0
        %1012 = vmatpush2.msra.mxu0 0.0
        %1013 = vmatprep.subr.mxu0 0.0
        %1014 = vmatpush2.msra.mxu0 0.0
        %1015 = vmatprep.subr.mxu0 0.0
        %1016 = vmatpush2.msra.mxu0 0.0
        %1017 = vmatprep.subr.mxu0 0.0
        %1018 = vmatpush2.msra.mxu0 0.0
        %1019 = vmatprep.mubr.f32.mxu0 0.0
        %1020 = vmatmul.mubr.f32.gmra.mxu0 %v876
        %v1021 = vpop.f32.mrf.mxu0
        %v1022 = vadd.f32 0.0, %v1021
        %v1023 = vpop.f32.mrf.mxu0
        %1024 = vdwg.mxu0
        %v1025 = vadd.f32 %v852, %v951
        %v1026 = vadd.f32 %v853, %v953
        %v1027 = vadd.f32 %v854, %v1022
        %v1028 = vld [vmem:[%s182] sm:$0xff]
        %v1029 = vld [vmem:[%s182 + $0x8] sm:$0xff]
        %s1030 = scalar_lea.vmem %s1, 40
        %v1031 = vld [vmem:[%s1030] sm:$0xff]
        %v1034 = vcombine.high %v1028, %v1028
        %v1035 = vcombine.high %v1029, %v1029
        %1036 = vrot.lane.b32.xlu0 %v1028, 108
        %v1037 = vpop.permute.xlu0 %1036
        %1038 = vrot.lane.b32.xlu0 %v1034, 108
        %v1039 = vpop.permute.xlu0 %1038
        %1040 = vrot.lane.b32.xlu0 %v1029, 108
        %v1041 = vpop.permute.xlu0 %1040
        %1042 = vrot.lane.b32.xlu0 %v1035, 108
        %v1043 = vpop.permute.xlu0 %1042
        %vm1044 = vcmask 883712
        %v1045 = vsel %vm1044, %v1037, %v1039
        %v1046 = vsel %vm1044, %v1039, %v1041
        %v1047 = vsel %vm1044, %v1041, %v1043
        %v1049 = vsel %vm206, %v1031, 0
        %v1051 = vsel %vm210, %v1045, 0
        %v1053 = vsel %vm210, %v1046, 0
        %v1055 = vsel %vm210, %v1047, 0
        %1057 = vmatprep.subr.mxu0 0.0
        %1058 = vmatpush1.msra.mxu0 0.0
        %1059 = vmatprep.subr.mxu0 0.0
        %1060 = vmatpush1.msra.mxu0 0.0
        %1061 = vmatprep.subr.mxu0 0.0
        %1062 = vmatpush1.msra.mxu0 0.0
        %1063 = vmatprep.subr.mxu0 0.0
        %1064 = vmatpush1.msra.mxu0 0.0
        %1065 = vmatprep.subr.mxu0 0.0
        %1066 = vmatpush1.msra.mxu0 0.0
        %1067 = vmatprep.subr.mxu0 0.0
        %1068 = vmatpush1.msra.mxu0 0.0
        %1069 = vmatprep.subr.mxu0 0.0
        %1070 = vmatpush1.msra.mxu0 0.0
        %1071 = vmatprep.subr.mxu0 0.0
        %1072 = vmatpush1.msra.mxu0 0.0
        %1073 = vmatprep.subr.mxu0 0.0
        %1074 = vmatpush1.msra.mxu0 0.0
        %1075 = vmatprep.subr.mxu0 0.0
        %1076 = vmatpush1.msra.mxu0 0.0
        %1077 = vmatprep.subr.mxu0 0.0
        %1078 = vmatpush1.msra.mxu0 0.0
        %1079 = vmatprep.subr.mxu0 0.0
        %1080 = vmatpush1.msra.mxu0 0.0
        %1081 = vmatprep.subr.mxu0 0.0
        %1082 = vmatpush1.msra.mxu0 0.0
        %1083 = vmatprep.subr.mxu0 0.0
        %1084 = vmatpush1.msra.mxu0 0.0
        %1085 = vmatprep.subr.mxu0 0.0
        %1086 = vmatpush1.msra.mxu0 0.0
        %1087 = vmatprep.subr.mxu0 %v1053
        %1088 = vmatpush1.msra.mxu0 %v1051
        %1089 = vmatprep.subr.mxu0 0.0
        %1090 = vmatpush2.msra.mxu0 0.0
        %1091 = vmatprep.subr.mxu0 0.0
        %1092 = vmatpush2.msra.mxu0 0.0
        %1093 = vmatprep.subr.mxu0 0.0
        %1094 = vmatpush2.msra.mxu0 0.0
        %1095 = vmatprep.subr.mxu0 0.0
        %1096 = vmatpush2.msra.mxu0 0.0
        %1097 = vmatprep.subr.mxu0 0.0
        %1098 = vmatpush2.msra.mxu0 0.0
        %1099 = vmatprep.subr.mxu0 0.0
        %1100 = vmatpush2.msra.mxu0 0.0
        %1101 = vmatprep.subr.mxu0 0.0
        %1102 = vmatpush2.msra.mxu0 0.0
        %1103 = vmatprep.subr.mxu0 0.0
        %1104 = vmatpush2.msra.mxu0 0.0
        %1105 = vmatprep.subr.mxu0 0.0
        %1106 = vmatpush2.msra.mxu0 0.0
        %1107 = vmatprep.subr.mxu0 0.0
        %1108 = vmatpush2.msra.mxu0 0.0
        %1109 = vmatprep.subr.mxu0 0.0
        %1110 = vmatpush2.msra.mxu0 0.0
        %1111 = vmatprep.subr.mxu0 0.0
        %1112 = vmatpush2.msra.mxu0 0.0
        %1113 = vmatprep.subr.mxu0 0.0
        %1114 = vmatpush2.msra.mxu0 0.0
        %1115 = vmatprep.subr.mxu0 0.0
        %1116 = vmatpush2.msra.mxu0 0.0
        %1117 = vmatprep.subr.mxu0 0.0
        %1118 = vmatpush2.msra.mxu0 0.0
        %1119 = vmatprep.subr.mxu0 0.0
        %1120 = vmatpush2.msra.mxu0 0.0
        %1121 = vmatprep.mubr.f32.mxu0 0.0
        %1122 = vmatmul.mubr.f32.gmra.mxu0 %v1049
        %v1123 = vpop.f32.mrf.mxu0
        %v1124 = vadd.f32 0.0, %v1123
        %v1125 = vpop.f32.mrf.mxu0
        %v1126 = vadd.f32 0.0, %v1125
        %1127 = vdwg.mxu0
        %1128 = vmatprep.subr.mxu0 0.0
        %1129 = vmatpush1.msra.mxu0 0.0
        %1130 = vmatprep.subr.mxu0 0.0
        %1131 = vmatpush1.msra.mxu0 0.0
        %1132 = vmatprep.subr.mxu0 0.0
        %1133 = vmatpush1.msra.mxu0 0.0
        %1134 = vmatprep.subr.mxu0 0.0
        %1135 = vmatpush1.msra.mxu0 0.0
        %1136 = vmatprep.subr.mxu0 0.0
        %1137 = vmatpush1.msra.mxu0 0.0
        %1138 = vmatprep.subr.mxu0 0.0
        %1139 = vmatpush1.msra.mxu0 0.0
        %1140 = vmatprep.subr.mxu0 0.0
        %1141 = vmatpush1.msra.mxu0 0.0
        %1142 = vmatprep.subr.mxu0 0.0
        %1143 = vmatpush1.msra.mxu0 0.0
        %1144 = vmatprep.subr.mxu0 0.0
        %1145 = vmatpush1.msra.mxu0 0.0
        %1146 = vmatprep.subr.mxu0 0.0
        %1147 = vmatpush1.msra.mxu0 0.0
        %1148 = vmatprep.subr.mxu0 0.0
        %1149 = vmatpush1.msra.mxu0 0.0
        %1150 = vmatprep.subr.mxu0 0.0
        %1151 = vmatpush1.msra.mxu0 0.0
        %1152 = vmatprep.subr.mxu0 0.0
        %1153 = vmatpush1.msra.mxu0 0.0
        %1154 = vmatprep.subr.mxu0 0.0
        %1155 = vmatpush1.msra.mxu0 0.0
        %1156 = vmatprep.subr.mxu0 0.0
        %1157 = vmatpush1.msra.mxu0 0.0
        %1158 = vmatprep.subr.mxu0 0.0
        %1159 = vmatpush1.msra.mxu0 %v1055
        %1160 = vmatprep.subr.mxu0 0.0
        %1161 = vmatpush2.msra.mxu0 0.0
        %1162 = vmatprep.subr.mxu0 0.0
        %1163 = vmatpush2.msra.mxu0 0.0
        %1164 = vmatprep.subr.mxu0 0.0
        %1165 = vmatpush2.msra.mxu0 0.0
        %1166 = vmatprep.subr.mxu0 0.0
        %1167 = vmatpush2.msra.mxu0 0.0
        %1168 = vmatprep.subr.mxu0 0.0
        %1169 = vmatpush2.msra.mxu0 0.0
        %1170 = vmatprep.subr.mxu0 0.0
        %1171 = vmatpush2.msra.mxu0 0.0
        %1172 = vmatprep.subr.mxu0 0.0
        %1173 = vmatpush2.msra.mxu0 0.0
        %1174 = vmatprep.subr.mxu0 0.0
        %1175 = vmatpush2.msra.mxu0 0.0
        %1176 = vmatprep.subr.mxu0 0.0
        %1177 = vmatpush2.msra.mxu0 0.0
        %1178 = vmatprep.subr.mxu0 0.0
        %1179 = vmatpush2.msra.mxu0 0.0
        %1180 = vmatprep.subr.mxu0 0.0
        %1181 = vmatpush2.msra.mxu0 0.0
        %1182 = vmatprep.subr.mxu0 0.0
        %1183 = vmatpush2.msra.mxu0 0.0
        %1184 = vmatprep.subr.mxu0 0.0
        %1185 = vmatpush2.msra.mxu0 0.0
        %1186 = vmatprep.subr.mxu0 0.0
        %1187 = vmatpush2.msra.mxu0 0.0
        %1188 = vmatprep.subr.mxu0 0.0
        %1189 = vmatpush2.msra.mxu0 0.0
        %1190 = vmatprep.subr.mxu0 0.0
        %1191 = vmatpush2.msra.mxu0 0.0
        %1192 = vmatprep.mubr.f32.mxu0 0.0
        %1193 = vmatmul.mubr.f32.gmra.mxu0 %v1049
        %v1194 = vpop.f32.mrf.mxu0
        %v1195 = vadd.f32 0.0, %v1194
        %v1196 = vpop.f32.mrf.mxu0
        %1197 = vdwg.mxu0
        %v1198 = vadd.f32 %v1025, %v1124
        %v1199 = vadd.f32 %v1026, %v1126
        %v1200 = vadd.f32 %v1027, %v1195
        %v1201 = vld [vmem:[%s182] sm:$0xff]
        %v1202 = vld [vmem:[%s182 + $0x8] sm:$0xff]
        %s1203 = scalar_lea.vmem %s1, 48
        %v1204 = vld [vmem:[%s1203] sm:$0xff]
        %v1207 = vcombine.high %v1201, %v1201
        %v1208 = vcombine.high %v1202, %v1202
        %1209 = vrot.lane.b32.xlu0 %v1201, 92
        %v1210 = vpop.permute.xlu0 %1209
        %1211 = vrot.lane.b32.xlu0 %v1207, 92
        %v1212 = vpop.permute.xlu0 %1211
        %1213 = vrot.lane.b32.xlu0 %v1202, 92
        %v1214 = vpop.permute.xlu0 %1213
        %1215 = vrot.lane.b32.xlu0 %v1208, 92
        %v1216 = vpop.permute.xlu0 %1215
        %vm1217 = vcmask 752640
        %v1218 = vsel %vm1217, %v1210, %v1212
        %v1219 = vsel %vm1217, %v1212, %v1214
        %v1220 = vsel %vm1217, %v1214, %v1216
        %v1222 = vsel %vm206, %v1204, 0
        %v1224 = vsel %vm210, %v1218, 0
        %v1226 = vsel %vm210, %v1219, 0
        %v1228 = vsel %vm210, %v1220, 0
        %1230 = vmatprep.subr.mxu0 0.0
        %1231 = vmatpush1.msra.mxu0 0.0
        %1232 = vmatprep.subr.mxu0 0.0
        %1233 = vmatpush1.msra.mxu0 0.0
        %1234 = vmatprep.subr.mxu0 0.0
        %1235 = vmatpush1.msra.mxu0 0.0
        %1236 = vmatprep.subr.mxu0 0.0
        %1237 = vmatpush1.msra.mxu0 0.0
        %1238 = vmatprep.subr.mxu0 0.0
        %1239 = vmatpush1.msra.mxu0 0.0
        %1240 = vmatprep.subr.mxu0 0.0
        %1241 = vmatpush1.msra.mxu0 0.0
        %1242 = vmatprep.subr.mxu0 0.0
        %1243 = vmatpush1.msra.mxu0 0.0
        %1244 = vmatprep.subr.mxu0 0.0
        %1245 = vmatpush1.msra.mxu0 0.0
        %1246 = vmatprep.subr.mxu0 0.0
        %1247 = vmatpush1.msra.mxu0 0.0
        %1248 = vmatprep.subr.mxu0 0.0
        %1249 = vmatpush1.msra.mxu0 0.0
        %1250 = vmatprep.subr.mxu0 0.0
        %1251 = vmatpush1.msra.mxu0 0.0
        %1252 = vmatprep.subr.mxu0 0.0
        %1253 = vmatpush1.msra.mxu0 0.0
        %1254 = vmatprep.subr.mxu0 0.0
        %1255 = vmatpush1.msra.mxu0 0.0
        %1256 = vmatprep.subr.mxu0 0.0
        %1257 = vmatpush1.msra.mxu0 0.0
        %1258 = vmatprep.subr.mxu0 0.0
        %1259 = vmatpush1.msra.mxu0 0.0
        %1260 = vmatprep.subr.mxu0 %v1226
        %1261 = vmatpush1.msra.mxu0 %v1224
        %1262 = vmatprep.subr.mxu0 0.0
        %1263 = vmatpush2.msra.mxu0 0.0
        %1264 = vmatprep.subr.mxu0 0.0
        %1265 = vmatpush2.msra.mxu0 0.0
        %1266 = vmatprep.subr.mxu0 0.0
        %1267 = vmatpush2.msra.mxu0 0.0
        %1268 = vmatprep.subr.mxu0 0.0
        %1269 = vmatpush2.msra.mxu0 0.0
        %1270 = vmatprep.subr.mxu0 0.0
        %1271 = vmatpush2.msra.mxu0 0.0
        %1272 = vmatprep.subr.mxu0 0.0
        %1273 = vmatpush2.msra.mxu0 0.0
        %1274 = vmatprep.subr.mxu0 0.0
        %1275 = vmatpush2.msra.mxu0 0.0
        %1276 = vmatprep.subr.mxu0 0.0
        %1277 = vmatpush2.msra.mxu0 0.0
        %1278 = vmatprep.subr.mxu0 0.0
        %1279 = vmatpush2.msra.mxu0 0.0
        %1280 = vmatprep.subr.mxu0 0.0
        %1281 = vmatpush2.msra.mxu0 0.0
        %1282 = vmatprep.subr.mxu0 0.0
        %1283 = vmatpush2.msra.mxu0 0.0
        %1284 = vmatprep.subr.mxu0 0.0
        %1285 = vmatpush2.msra.mxu0 0.0
        %1286 = vmatprep.subr.mxu0 0.0
        %1287 = vmatpush2.msra.mxu0 0.0
        %1288 = vmatprep.subr.mxu0 0.0
        %1289 = vmatpush2.msra.mxu0 0.0
        %1290 = vmatprep.subr.mxu0 0.0
        %1291 = vmatpush2.msra.mxu0 0.0
        %1292 = vmatprep.subr.mxu0 0.0
        %1293 = vmatpush2.msra.mxu0 0.0
        %1294 = vmatprep.mubr.f32.mxu0 0.0
        %1295 = vmatmul.mubr.f32.gmra.mxu0 %v1222
        %v1296 = vpop.f32.mrf.mxu0
        %v1297 = vadd.f32 0.0, %v1296
        %v1298 = vpop.f32.mrf.mxu0
        %v1299 = vadd.f32 0.0, %v1298
        %1300 = vdwg.mxu0
        %1301 = vmatprep.subr.mxu0 0.0
        %1302 = vmatpush1.msra.mxu0 0.0
        %1303 = vmatprep.subr.mxu0 0.0
        %1304 = vmatpush1.msra.mxu0 0.0
        %1305 = vmatprep.subr.mxu0 0.0
        %1306 = vmatpush1.msra.mxu0 0.0
        %1307 = vmatprep.subr.mxu0 0.0
        %1308 = vmatpush1.msra.mxu0 0.0
        %1309 = vmatprep.subr.mxu0 0.0
        %1310 = vmatpush1.msra.mxu0 0.0
        %1311 = vmatprep.subr.mxu0 0.0
        %1312 = vmatpush1.msra.mxu0 0.0
        %1313 = vmatprep.subr.mxu0 0.0
        %1314 = vmatpush1.msra.mxu0 0.0
        %1315 = vmatprep.subr.mxu0 0.0
        %1316 = vmatpush1.msra.mxu0 0.0
        %1317 = vmatprep.subr.mxu0 0.0
        %1318 = vmatpush1.msra.mxu0 0.0
        %1319 = vmatprep.subr.mxu0 0.0
        %1320 = vmatpush1.msra.mxu0 0.0
        %1321 = vmatprep.subr.mxu0 0.0
        %1322 = vmatpush1.msra.mxu0 0.0
        %1323 = vmatprep.subr.mxu0 0.0
        %1324 = vmatpush1.msra.mxu0 0.0
        %1325 = vmatprep.subr.mxu0 0.0
        %1326 = vmatpush1.msra.mxu0 0.0
        %1327 = vmatprep.subr.mxu0 0.0
        %1328 = vmatpush1.msra.mxu0 0.0
        %1329 = vmatprep.subr.mxu0 0.0
        %1330 = vmatpush1.msra.mxu0 0.0
        %1331 = vmatprep.subr.mxu0 0.0
        %1332 = vmatpush1.msra.mxu0 %v1228
        %1333 = vmatprep.subr.mxu0 0.0
        %1334 = vmatpush2.msra.mxu0 0.0
        %1335 = vmatprep.subr.mxu0 0.0
        %1336 = vmatpush2.msra.mxu0 0.0
        %1337 = vmatprep.subr.mxu0 0.0
        %1338 = vmatpush2.msra.mxu0 0.0
        %1339 = vmatprep.subr.mxu0 0.0
        %1340 = vmatpush2.msra.mxu0 0.0
        %1341 = vmatprep.subr.mxu0 0.0
        %1342 = vmatpush2.msra.mxu0 0.0
        %1343 = vmatprep.subr.mxu0 0.0
        %1344 = vmatpush2.msra.mxu0 0.0
        %1345 = vmatprep.subr.mxu0 0.0
        %1346 = vmatpush2.msra.mxu0 0.0
        %1347 = vmatprep.subr.mxu0 0.0
        %1348 = vmatpush2.msra.mxu0 0.0
        %1349 = vmatprep.subr.mxu0 0.0
        %1350 = vmatpush2.msra.mxu0 0.0
        %1351 = vmatprep.subr.mxu0 0.0
        %1352 = vmatpush2.msra.mxu0 0.0
        %1353 = vmatprep.subr.mxu0 0.0
        %1354 = vmatpush2.msra.mxu0 0.0
        %1355 = vmatprep.subr.mxu0 0.0
        %1356 = vmatpush2.msra.mxu0 0.0
        %1357 = vmatprep.subr.mxu0 0.0
        %1358 = vmatpush2.msra.mxu0 0.0
        %1359 = vmatprep.subr.mxu0 0.0
        %1360 = vmatpush2.msra.mxu0 0.0
        %1361 = vmatprep.subr.mxu0 0.0
        %1362 = vmatpush2.msra.mxu0 0.0
        %1363 = vmatprep.subr.mxu0 0.0
        %1364 = vmatpush2.msra.mxu0 0.0
        %1365 = vmatprep.mubr.f32.mxu0 0.0
        %1366 = vmatmul.mubr.f32.gmra.mxu0 %v1222
        %v1367 = vpop.f32.mrf.mxu0
        %v1368 = vadd.f32 0.0, %v1367
        %v1369 = vpop.f32.mrf.mxu0
        %1370 = vdwg.mxu0
        %v1371 = vadd.f32 %v1198, %v1297
        %v1372 = vadd.f32 %v1199, %v1299
        %v1373 = vadd.f32 %v1200, %v1368
        %v1374 = vld [vmem:[%s182] sm:$0xff]
        %v1375 = vld [vmem:[%s182 + $0x8] sm:$0xff]
        %s1376 = scalar_lea.vmem %s1, 56
        %v1377 = vld [vmem:[%s1376] sm:$0xff]
        %v1380 = vcombine.high %v1374, %v1374
        %v1381 = vcombine.high %v1375, %v1375
        %1382 = vrot.lane.b32.xlu0 %v1374, 91
        %v1383 = vpop.permute.xlu0 %1382
        %1384 = vrot.lane.b32.xlu0 %v1380, 91
        %v1385 = vpop.permute.xlu0 %1384
        %1386 = vrot.lane.b32.xlu0 %v1375, 91
        %v1387 = vpop.permute.xlu0 %1386
        %1388 = vrot.lane.b32.xlu0 %v1381, 91
        %v1389 = vpop.permute.xlu0 %1388
        %vm1390 = vcmask 744448
        %v1391 = vsel %vm1390, %v1383, %v1385
        %v1392 = vsel %vm1390, %v1385, %v1387
        %v1393 = vsel %vm1390, %v1387, %v1389
        %v1395 = vsel %vm206, %v1377, 0
        %v1397 = vsel %vm210, %v1391, 0
        %v1399 = vsel %vm210, %v1392, 0
        %v1401 = vsel %vm210, %v1393, 0
        %1403 = vmatprep.subr.mxu0 0.0
        %1404 = vmatpush1.msra.mxu0 0.0
        %1405 = vmatprep.subr.mxu0 0.0
        %1406 = vmatpush1.msra.mxu0 0.0
        %1407 = vmatprep.subr.mxu0 0.0
        %1408 = vmatpush1.msra.mxu0 0.0
        %1409 = vmatprep.subr.mxu0 0.0
        %1410 = vmatpush1.msra.mxu0 0.0
        %1411 = vmatprep.subr.mxu0 0.0
        %1412 = vmatpush1.msra.mxu0 0.0
        %1413 = vmatprep.subr.mxu0 0.0
        %1414 = vmatpush1.msra.mxu0 0.0
        %1415 = vmatprep.subr.mxu0 0.0
        %1416 = vmatpush1.msra.mxu0 0.0
        %1417 = vmatprep.subr.mxu0 0.0
        %1418 = vmatpush1.msra.mxu0 0.0
        %1419 = vmatprep.subr.mxu0 0.0
        %1420 = vmatpush1.msra.mxu0 0.0
        %1421 = vmatprep.subr.mxu0 0.0
        %1422 = vmatpush1.msra.mxu0 0.0
        %1423 = vmatprep.subr.mxu0 0.0
        %1424 = vmatpush1.msra.mxu0 0.0
        %1425 = vmatprep.subr.mxu0 0.0
        %1426 = vmatpush1.msra.mxu0 0.0
        %1427 = vmatprep.subr.mxu0 0.0
        %1428 = vmatpush1.msra.mxu0 0.0
        %1429 = vmatprep.subr.mxu0 0.0
        %1430 = vmatpush1.msra.mxu0 0.0
        %1431 = vmatprep.subr.mxu0 0.0
        %1432 = vmatpush1.msra.mxu0 0.0
        %1433 = vmatprep.subr.mxu0 %v1399
        %1434 = vmatpush1.msra.mxu0 %v1397
        %1435 = vmatprep.subr.mxu0 0.0
        %1436 = vmatpush2.msra.mxu0 0.0
        %1437 = vmatprep.subr.mxu0 0.0
        %1438 = vmatpush2.msra.mxu0 0.0
        %1439 = vmatprep.subr.mxu0 0.0
        %1440 = vmatpush2.msra.mxu0 0.0
        %1441 = vmatprep.subr.mxu0 0.0
        %1442 = vmatpush2.msra.mxu0 0.0
        %1443 = vmatprep.subr.mxu0 0.0
        %1444 = vmatpush2.msra.mxu0 0.0
        %1445 = vmatprep.subr.mxu0 0.0
        %1446 = vmatpush2.msra.mxu0 0.0
        %1447 = vmatprep.subr.mxu0 0.0
        %1448 = vmatpush2.msra.mxu0 0.0
        %1449 = vmatprep.subr.mxu0 0.0
        %1450 = vmatpush2.msra.mxu0 0.0
        %1451 = vmatprep.subr.mxu0 0.0
        %1452 = vmatpush2.msra.mxu0 0.0
        %1453 = vmatprep.subr.mxu0 0.0
        %1454 = vmatpush2.msra.mxu0 0.0
        %1455 = vmatprep.subr.mxu0 0.0
        %1456 = vmatpush2.msra.mxu0 0.0
        %1457 = vmatprep.subr.mxu0 0.0
        %1458 = vmatpush2.msra.mxu0 0.0
        %1459 = vmatprep.subr.mxu0 0.0
        %1460 = vmatpush2.msra.mxu0 0.0
        %1461 = vmatprep.subr.mxu0 0.0
        %1462 = vmatpush2.msra.mxu0 0.0
        %1463 = vmatprep.subr.mxu0 0.0
        %1464 = vmatpush2.msra.mxu0 0.0
        %1465 = vmatprep.subr.mxu0 0.0
        %1466 = vmatpush2.msra.mxu0 0.0
        %1467 = vmatprep.mubr.f32.mxu0 0.0
        %1468 = vmatmul.mubr.f32.gmra.mxu0 %v1395
        %v1469 = vpop.f32.mrf.mxu0
        %v1470 = vadd.f32 0.0, %v1469
        %v1471 = vpop.f32.mrf.mxu0
        %v1472 = vadd.f32 0.0, %v1471
        %1473 = vdwg.mxu0
        %1474 = vmatprep.subr.mxu0 0.0
        %1475 = vmatpush1.msra.mxu0 0.0
        %1476 = vmatprep.subr.mxu0 0.0
        %1477 = vmatpush1.msra.mxu0 0.0
        %1478 = vmatprep.subr.mxu0 0.0
        %1479 = vmatpush1.msra.mxu0 0.0
        %1480 = vmatprep.subr.mxu0 0.0
        %1481 = vmatpush1.msra.mxu0 0.0
        %1482 = vmatprep.subr.mxu0 0.0
        %1483 = vmatpush1.msra.mxu0 0.0
        %1484 = vmatprep.subr.mxu0 0.0
        %1485 = vmatpush1.msra.mxu0 0.0
        %1486 = vmatprep.subr.mxu0 0.0
        %1487 = vmatpush1.msra.mxu0 0.0
        %1488 = vmatprep.subr.mxu0 0.0
        %1489 = vmatpush1.msra.mxu0 0.0
        %1490 = vmatprep.subr.mxu0 0.0
        %1491 = vmatpush1.msra.mxu0 0.0
        %1492 = vmatprep.subr.mxu0 0.0
        %1493 = vmatpush1.msra.mxu0 0.0
        %1494 = vmatprep.subr.mxu0 0.0
        %1495 = vmatpush1.msra.mxu0 0.0
        %1496 = vmatprep.subr.mxu0 0.0
        %1497 = vmatpush1.msra.mxu0 0.0
        %1498 = vmatprep.subr.mxu0 0.0
        %1499 = vmatpush1.msra.mxu0 0.0
        %1500 = vmatprep.subr.mxu0 0.0
        %1501 = vmatpush1.msra.mxu0 0.0
        %1502 = vmatprep.subr.mxu0 0.0
        %1503 = vmatpush1.msra.mxu0 0.0
        %1504 = vmatprep.subr.mxu0 0.0
        %1505 = vmatpush1.msra.mxu0 %v1401
        %1506 = vmatprep.subr.mxu0 0.0
        %1507 = vmatpush2.msra.mxu0 0.0
        %1508 = vmatprep.subr.mxu0 0.0
        %1509 = vmatpush2.msra.mxu0 0.0
        %1510 = vmatprep.subr.mxu0 0.0
        %1511 = vmatpush2.msra.mxu0 0.0
        %1512 = vmatprep.subr.mxu0 0.0
        %1513 = vmatpush2.msra.mxu0 0.0
        %1514 = vmatprep.subr.mxu0 0.0
        %1515 = vmatpush2.msra.mxu0 0.0
        %1516 = vmatprep.subr.mxu0 0.0
        %1517 = vmatpush2.msra.mxu0 0.0
        %1518 = vmatprep.subr.mxu0 0.0
        %1519 = vmatpush2.msra.mxu0 0.0
        %1520 = vmatprep.subr.mxu0 0.0
        %1521 = vmatpush2.msra.mxu0 0.0
        %1522 = vmatprep.subr.mxu0 0.0
        %1523 = vmatpush2.msra.mxu0 0.0
        %1524 = vmatprep.subr.mxu0 0.0
        %1525 = vmatpush2.msra.mxu0 0.0
        %1526 = vmatprep.subr.mxu0 0.0
        %1527 = vmatpush2.msra.mxu0 0.0
        %1528 = vmatprep.subr.mxu0 0.0
        %1529 = vmatpush2.msra.mxu0 0.0
        %1530 = vmatprep.subr.mxu0 0.0
        %1531 = vmatpush2.msra.mxu0 0.0
        %1532 = vmatprep.subr.mxu0 0.0
        %1533 = vmatpush2.msra.mxu0 0.0
        %1534 = vmatprep.subr.mxu0 0.0
        %1535 = vmatpush2.msra.mxu0 0.0
        %1536 = vmatprep.subr.mxu0 0.0
        %1537 = vmatpush2.msra.mxu0 0.0
        %1538 = vmatprep.mubr.f32.mxu0 0.0
        %1539 = vmatmul.mubr.f32.gmra.mxu0 %v1395
        %v1540 = vpop.f32.mrf.mxu0
        %v1541 = vadd.f32 0.0, %v1540
        %v1542 = vpop.f32.mrf.mxu0
        %1543 = vdwg.mxu0
        %v1544 = vadd.f32 %v1371, %v1470
        %v1545 = vadd.f32 %v1372, %v1472
        %v1546 = vadd.f32 %v1373, %v1541
        %v1547 = vld [vmem:[%s182] sm:$0xff]
        %v1548 = vld [vmem:[%s182 + $0x8] sm:$0xff]
        %s1549 = scalar_lea.vmem %s1, 64
        %v1550 = vld [vmem:[%s1549] sm:$0xff]
        %v1553 = vcombine.high %v1547, %v1547
        %v1554 = vcombine.high %v1548, %v1548
        %1555 = vrot.lane.b32.xlu0 %v1547, 90
        %v1556 = vpop.permute.xlu0 %1555
        %1557 = vrot.lane.b32.xlu0 %v1553, 90
        %v1558 = vpop.permute.xlu0 %1557
        %1559 = vrot.lane.b32.xlu0 %v1548, 90
        %v1560 = vpop.permute.xlu0 %1559
        %1561 = vrot.lane.b32.xlu0 %v1554, 90
        %v1562 = vpop.permute.xlu0 %1561
        %vm1563 = vcmask 736256
        %v1564 = vsel %vm1563, %v1556, %v1558
        %v1565 = vsel %vm1563, %v1558, %v1560
        %v1566 = vsel %vm1563, %v1560, %v1562
        %v1568 = vsel %vm206, %v1550, 0
        %v1570 = vsel %vm210, %v1564, 0
        %v1572 = vsel %vm210, %v1565, 0
        %v1574 = vsel %vm210, %v1566, 0
        %1576 = vmatprep.subr.mxu0 0.0
        %1577 = vmatpush1.msra.mxu0 0.0
        %1578 = vmatprep.subr.mxu0 0.0
        %1579 = vmatpush1.msra.mxu0 0.0
        %1580 = vmatprep.subr.mxu0 0.0
        %1581 = vmatpush1.msra.mxu0 0.0
        %1582 = vmatprep.subr.mxu0 0.0
        %1583 = vmatpush1.msra.mxu0 0.0
        %1584 = vmatprep.subr.mxu0 0.0
        %1585 = vmatpush1.msra.mxu0 0.0
        %1586 = vmatprep.subr.mxu0 0.0
        %1587 = vmatpush1.msra.mxu0 0.0
        %1588 = vmatprep.subr.mxu0 0.0
        %1589 = vmatpush1.msra.mxu0 0.0
        %1590 = vmatprep.subr.mxu0 0.0
        %1591 = vmatpush1.msra.mxu0 0.0
        %1592 = vmatprep.subr.mxu0 0.0
        %1593 = vmatpush1.msra.mxu0 0.0
        %1594 = vmatprep.subr.mxu0 0.0
        %1595 = vmatpush1.msra.mxu0 0.0
        %1596 = vmatprep.subr.mxu0 0.0
        %1597 = vmatpush1.msra.mxu0 0.0
        %1598 = vmatprep.subr.mxu0 0.0
        %1599 = vmatpush1.msra.mxu0 0.0
        %1600 = vmatprep.subr.mxu0 0.0
        %1601 = vmatpush1.msra.mxu0 0.0
        %1602 = vmatprep.subr.mxu0 0.0
        %1603 = vmatpush1.msra.mxu0 0.0
        %1604 = vmatprep.subr.mxu0 0.0
        %1605 = vmatpush1.msra.mxu0 0.0
        %1606 = vmatprep.subr.mxu0 %v1572
        %1607 = vmatpush1.msra.mxu0 %v1570
        %1608 = vmatprep.subr.mxu0 0.0
        %1609 = vmatpush2.msra.mxu0 0.0
        %1610 = vmatprep.subr.mxu0 0.0
        %1611 = vmatpush2.msra.mxu0 0.0
        %1612 = vmatprep.subr.mxu0 0.0
        %1613 = vmatpush2.msra.mxu0 0.0
        %1614 = vmatprep.subr.mxu0 0.0
        %1615 = vmatpush2.msra.mxu0 0.0
        %1616 = vmatprep.subr.mxu0 0.0
        %1617 = vmatpush2.msra.mxu0 0.0
        %1618 = vmatprep.subr.mxu0 0.0
        %1619 = vmatpush2.msra.mxu0 0.0
        %1620 = vmatprep.subr.mxu0 0.0
        %1621 = vmatpush2.msra.mxu0 0.0
        %1622 = vmatprep.subr.mxu0 0.0
        %1623 = vmatpush2.msra.mxu0 0.0
        %1624 = vmatprep.subr.mxu0 0.0
        %1625 = vmatpush2.msra.mxu0 0.0
        %1626 = vmatprep.subr.mxu0 0.0
        %1627 = vmatpush2.msra.mxu0 0.0
        %1628 = vmatprep.subr.mxu0 0.0
        %1629 = vmatpush2.msra.mxu0 0.0
        %1630 = vmatprep.subr.mxu0 0.0
        %1631 = vmatpush2.msra.mxu0 0.0
        %1632 = vmatprep.subr.mxu0 0.0
        %1633 = vmatpush2.msra.mxu0 0.0
        %1634 = vmatprep.subr.mxu0 0.0
        %1635 = vmatpush2.msra.mxu0 0.0
        %1636 = vmatprep.subr.mxu0 0.0
        %1637 = vmatpush2.msra.mxu0 0.0
        %1638 = vmatprep.subr.mxu0 0.0
        %1639 = vmatpush2.msra.mxu0 0.0
        %1640 = vmatprep.mubr.f32.mxu0 0.0
        %1641 = vmatmul.mubr.f32.gmra.mxu0 %v1568
        %v1642 = vpop.f32.mrf.mxu0
        %v1643 = vadd.f32 0.0, %v1642
        %v1644 = vpop.f32.mrf.mxu0
        %v1645 = vadd.f32 0.0, %v1644
        %1646 = vdwg.mxu0
        %1647 = vmatprep.subr.mxu0 0.0
        %1648 = vmatpush1.msra.mxu0 0.0
        %1649 = vmatprep.subr.mxu0 0.0
        %1650 = vmatpush1.msra.mxu0 0.0
        %1651 = vmatprep.subr.mxu0 0.0
        %1652 = vmatpush1.msra.mxu0 0.0
        %1653 = vmatprep.subr.mxu0 0.0
        %1654 = vmatpush1.msra.mxu0 0.0
        %1655 = vmatprep.subr.mxu0 0.0
        %1656 = vmatpush1.msra.mxu0 0.0
        %1657 = vmatprep.subr.mxu0 0.0
        %1658 = vmatpush1.msra.mxu0 0.0
        %1659 = vmatprep.subr.mxu0 0.0
        %1660 = vmatpush1.msra.mxu0 0.0
        %1661 = vmatprep.subr.mxu0 0.0
        %1662 = vmatpush1.msra.mxu0 0.0
        %1663 = vmatprep.subr.mxu0 0.0
        %1664 = vmatpush1.msra.mxu0 0.0
        %1665 = vmatprep.subr.mxu0 0.0
        %1666 = vmatpush1.msra.mxu0 0.0
        %1667 = vmatprep.subr.mxu0 0.0
        %1668 = vmatpush1.msra.mxu0 0.0
        %1669 = vmatprep.subr.mxu0 0.0
        %1670 = vmatpush1.msra.mxu0 0.0
        %1671 = vmatprep.subr.mxu0 0.0
        %1672 = vmatpush1.msra.mxu0 0.0
        %1673 = vmatprep.subr.mxu0 0.0
        %1674 = vmatpush1.msra.mxu0 0.0
        %1675 = vmatprep.subr.mxu0 0.0
        %1676 = vmatpush1.msra.mxu0 0.0
        %1677 = vmatprep.subr.mxu0 0.0
        %1678 = vmatpush1.msra.mxu0 %v1574
        %1679 = vmatprep.subr.mxu0 0.0
        %1680 = vmatpush2.msra.mxu0 0.0
        %1681 = vmatprep.subr.mxu0 0.0
        %1682 = vmatpush2.msra.mxu0 0.0
        %1683 = vmatprep.subr.mxu0 0.0
        %1684 = vmatpush2.msra.mxu0 0.0
        %1685 = vmatprep.subr.mxu0 0.0
        %1686 = vmatpush2.msra.mxu0 0.0
        %1687 = vmatprep.subr.mxu0 0.0
        %1688 = vmatpush2.msra.mxu0 0.0
        %1689 = vmatprep.subr.mxu0 0.0
        %1690 = vmatpush2.msra.mxu0 0.0
        %1691 = vmatprep.subr.mxu0 0.0
        %1692 = vmatpush2.msra.mxu0 0.0
        %1693 = vmatprep.subr.mxu0 0.0
        %1694 = vmatpush2.msra.mxu0 0.0
        %1695 = vmatprep.subr.mxu0 0.0
        %1696 = vmatpush2.msra.mxu0 0.0
        %1697 = vmatprep.subr.mxu0 0.0
        %1698 = vmatpush2.msra.mxu0 0.0
        %1699 = vmatprep.subr.mxu0 0.0
        %1700 = vmatpush2.msra.mxu0 0.0
        %1701 = vmatprep.subr.mxu0 0.0
        %1702 = vmatpush2.msra.mxu0 0.0
        %1703 = vmatprep.subr.mxu0 0.0
        %1704 = vmatpush2.msra.mxu0 0.0
        %1705 = vmatprep.subr.mxu0 0.0
        %1706 = vmatpush2.msra.mxu0 0.0
        %1707 = vmatprep.subr.mxu0 0.0
        %1708 = vmatpush2.msra.mxu0 0.0
        %1709 = vmatprep.subr.mxu0 0.0
        %1710 = vmatpush2.msra.mxu0 0.0
        %1711 = vmatprep.mubr.f32.mxu0 0.0
        %1712 = vmatmul.mubr.f32.gmra.mxu0 %v1568
        %v1713 = vpop.f32.mrf.mxu0
        %v1714 = vadd.f32 0.0, %v1713
        %v1715 = vpop.f32.mrf.mxu0
        %1716 = vdwg.mxu0
        %v1717 = vadd.f32 %v1544, %v1643
        %v1718 = vadd.f32 %v1545, %v1645
        %v1719 = vadd.f32 %v1546, %v1714
        %v1720 = vld [vmem:[%s2] sm:$0xff]
        %1722 = vset.pattern.permute.xlu0 0
        %1723 = vperm.xlu0 %1722, %v1720
        %v1724 = vpop.permute.xlu0 %1723
        %v1726 = vadd.f32 %v1717, %v1724
        %v1727 = vadd.f32 %v1718, %v1724
        %v1728 = vadd.f32 %v1719, %v1724
        %1729 = vst [vmem:[%s177] sm:$0xff] %v1726
        %1730 = vst [vmem:[%s177 + $0x8] sm:$0xff] %v1727
        %1731 = vst [vmem:[%s177 + $0x10] sm:$0xff] %v1728
        %s1732 = sand.u32 %s107, 1
        %s1733 = scalar_lea.sflag [#allocation3], %s1732
        %s1734 = sand.u32 %s107, 1
        %s1735 = smul.addr %s1734, 24
        %s1736 = scalar_lea.vmem [#allocation2], %s1735
        // Predicated region
        $region33: #{tpu_custom_call.1} parent=31 // pred_check
          %p1737 = pneg %p117
        $region34: #{tpu_custom_call.1} parent=31 // pred_check_branch
          %1739 = sbr.rel (%p1737) target = $region36
        $region35: #{tpu_custom_call.1} parent=31 // pred_region
          %s1740 = smul.u32 3, %s22
          %s1742 = ssub.s32 384, 384
          %1743 = vsyncadd %s1733, %s1742
          %s1744 = smul.addr %s21, 3
          %s1745 = sadd.s32 %s1740, %s1744
          %s1746 = smul.addr %s1745, 128
          %s1747 = scalar_lea.hbm %s3, %s1746
          %s1749 = sshll.u32 %s1736, 4
          %s1750 = int_to_ptr.vmem [resolvable:$true] %s1749
          %1752 = dma.vmem_to_hbm [thread:$0]  %s1750, 384, %s1747, %s1733
        $region36: #{tpu_custom_call.1} parent=31 // pred_fallthru
          _
      $region32: #{tpu_custom_call.1} parent=5 // pred_fallthru
        _
      %p1753 = scmp.le.s32.totalorder 2, %s12
      // Predicated region
      $region37: #{tpu_custom_call.1} parent=5 // pred_check
        %p1754 = pneg %p1753
      $region38: #{tpu_custom_call.1} parent=5 // pred_check_branch
        %1756 = sbr.rel (%p1754) target = $region40
      $region39: #{tpu_custom_call.1} parent=5 // pred_region
        %s1757 = ssub.s32 %s12, 2
        // Predicated region
        $region41: #{tpu_custom_call.1} parent=39 // pred_check
          %p1758 = pneg %p123
        $region42: #{tpu_custom_call.1} parent=39 // pred_check_branch
          %1760 = sbr.rel (%p1758) target = $region44
        $region43: #{tpu_custom_call.1} parent=39 // pred_region
          %s1761 = sand.u32 %s108, 1
          %s1762 = scalar_lea.sflag [#allocation3], %s1761
          %s1763 = sand.u32 %s108, 1
          %s1764 = smul.addr %s1763, 24
          %s1765 = scalar_lea.vmem [#allocation2], %s1764
          %1766 = dma.done %s1762, 384
        $region44: #{tpu_custom_call.1} parent=39 // pred_fallthru
          _
      $region40: #{tpu_custom_call.1} parent=5 // pred_fallthru
        _
    $region6: #{tpu_custom_call.1} parent=1 // loop_footer
      %s16 = sadd.s32 1, %s12
    $region7: #{tpu_custom_call.1} parent=1 // loop_footer_branch
      %11 = sbr.rel target = $region3
    $region8: #{tpu_custom_call.1} parent=1 // loop_exit
      _
    %1767 = vsyncpa [#allocation3], 1
    %s1768 = scalar_lea.sflag [#allocation3], 1
    %1769 = vsyncpa %s1768, 1

</llo_original>
